<compile_context>
chip_gen: v6e
topology: v6e:2x2x1
jax: 0.10.0
libtpu: 0.0.40
codegen_flags: <defaults>
</compile_context>

<pallas_src>
import functools

import jax
import jax.numpy as jnp
from jax import lax
from jax.experimental import pallas as pl
from jax.experimental.pallas import tpu as pltpu

# ----------------------------- toy ViT config --------------------------------
B, C, IMG, PATCH = 2, 3, 16, 8
N_PATCH = (IMG // PATCH) ** 2          # 4 patches per image
SEQ = N_PATCH + 1                      # 5 real tokens (CLS + patches)
SEQ_PAD = 8                            # tokens per image padded to one sublane tile
WIDTH = 32                             # transformer width
HEADS = 4
HEAD_DIM = WIDTH // HEADS              # 8
MLP = 4 * WIDTH                        # 128
LAYERS = 2
EMBED = 128                            # lane-dense stand-in for CHANNELS['ViT-L/14']=768
NUM_FC = 5                             # 5 x Linear(EMBED, 1) heads
PATCH_DIM = C * PATCH * PATCH          # 192
ROWS = B * SEQ_PAD                     # 16  (all tokens, padded, whole batch)
NSTK = HEADS * ROWS                    # 64  (heads stacked along sublanes)


# --------------------------- fused encoder kernel ----------------------------
def _clip_encoder_kernel(
    # resident inputs
    patches_ref, conv_w_ref, cls_emb_ref, pos_ref, ln_pre_g_ref, ln_pre_b_ref,
    # per-layer (streamed) inputs
    ln1_g_ref, ln1_b_ref, qkv_w_ref, qkv_b_ref, attn_w_ref, attn_b_ref,
    ln2_g_ref, ln2_b_ref, fc1_w_ref, fc1_b_ref, fc2_w_ref, fc2_b_ref,
    # resident epilogue inputs
    ln_post_g_ref, ln_post_b_ref, vproj_ref,
    # outputs
    feats_ref,
    # scratch (activations carried across the LAYERS grid axis)
    xbuf,
):
    l = pl.program_id(0)

    def ln(x, g, b):
        mu = jnp.mean(x, axis=-1, keepdims=True)
        var = jnp.mean(jnp.square(x - mu), axis=-1, keepdims=True)
        return (x - mu) * lax.rsqrt(var + 1e-5) * g + b

    def mm(a, w):
        # bf16 MXU operands, f32 accumulation
        return jnp.dot(a.astype(jnp.bfloat16), w,
                       preferred_element_type=jnp.float32)

    # ------------- step 0: patch embed + CLS + pos + ln_pre ------------------
    @pl.when(l == 0)
    def _():
        pemb = mm(patches_ref[...], conv_w_ref[...])             # (B*N_PATCH, W)
        cls_tok = cls_emb_ref[...] + pos_ref[0:1, :]             # (1, W)
        pad = jnp.zeros((SEQ_PAD - SEQ, WIDTH), jnp.float32)
        blocks = []
        for b in range(B):
            blocks.append(cls_tok)
            blocks.append(pemb[b * N_PATCH:(b + 1) * N_PATCH, :] + pos_ref[1:SEQ, :])
            blocks.append(pad)
        x0 = jnp.concatenate(blocks, axis=0)                     # (ROWS, W)
        xbuf[...] = ln(x0, ln_pre_g_ref[...], ln_pre_b_ref[...])  # one full-tile store

    # ------------------------ transformer layer l ----------------------------
    x = xbuf[...]                                                # (ROWS, W) f32

    # multi-head self attention (pre-LN residual block)
    h1 = ln(x, ln1_g_ref[...], ln1_b_ref[...])
    qkv = mm(h1, qkv_w_ref[...]) + qkv_b_ref[...]                # (ROWS, 3W)
    q = qkv[:, 0 * WIDTH:1 * WIDTH]
    k = qkv[:, 1 * WIDTH:2 * WIDTH]
    v = qkv[:, 2 * WIDTH:3 * WIDTH]

    def stack_heads(t):  # (ROWS, W) -> (HEADS*ROWS, HEAD_DIM), heads along sublanes
        return jnp.concatenate(
            [t[:, h * HEAD_DIM:(h + 1) * HEAD_DIM] for h in range(HEADS)], axis=0)

    qs = stack_heads(q).astype(jnp.bfloat16)
    ks = stack_heads(k).astype(jnp.bfloat16)
    vs = stack_heads(v).astype(jnp.bfloat16)

    scale = 1.0 / (HEAD_DIM ** 0.5)
    # one score matmul for all (head, batch) blocks; contract last dims (no k.T)
    s = lax.dot_general(qs, ks, (((1,), (1,)), ((), ())),
                        preferred_element_type=jnp.float32) * scale    # (NSTK, NSTK)

    # static block-diagonal mask: same (head, batch) block AND real (non-pad) key.
    # SEQ_PAD is a power of two -> use shift / bitwise-and instead of // and %.
    ri = lax.broadcasted_iota(jnp.int32, (NSTK, NSTK), 0)
    ci = lax.broadcasted_iota(jnp.int32, (NSTK, NSTK), 1)
    same_block = (ri >> 3) == (ci >> 3)
    key_real = (ci & (SEQ_PAD - 1)) < SEQ
    s = jnp.where(same_block & key_real, s, -1e30)               # -inf-like BEFORE exp

    s = s - jnp.max(s, axis=-1, keepdims=True)
    p = jnp.exp(s)
    p = p * pl.reciprocal(jnp.sum(p, axis=-1, keepdims=True), approx=True)
    o = jnp.dot(p.astype(jnp.bfloat16), vs,
                preferred_element_type=jnp.float32)              # (NSTK, HEAD_DIM)

    # un-stack heads back onto lanes (sublane slices at multiples of ROWS=16)
    attn = jnp.concatenate(
        [o[h * ROWS:(h + 1) * ROWS, :] for h in range(HEADS)], axis=1)  # (ROWS, W)
    x = x + mm(attn, attn_w_ref[...]) + attn_b_ref[...]

    # MLP: fc1 -> QuickGELU -> fc2
    h2 = ln(x, ln2_g_ref[...], ln2_b_ref[...])
    hmid = mm(h2, fc1_w_ref[...]) + fc1_b_ref[...]
    hmid = hmid * jax.nn.sigmoid(1.702 * hmid)                   # QuickGELU
    x = x + mm(hmid, fc2_w_ref[...]) + fc2_b_ref[...]

    xbuf[...] = x                                                # carry to next layer

    # -------------- last step: ln_post on CLS rows + projection --------------
    @pl.when(l == pl.num_programs(0) - 1)
    def _():
        cls_rows = jnp.concatenate(
            [x[b * SEQ_PAD:b * SEQ_PAD + 1, :] for b in range(B)], axis=0)  # (B, W)
        cls_ln = ln(cls_rows, ln_post_g_ref[...], ln_post_b_ref[...])
        feats_ref[...] = mm(cls_ln, vproj_ref[...])              # (B, EMBED) lane-dense


def _resident(shape):
    zeros = (0,) * len(shape)
    return pl.BlockSpec(shape, lambda l: zeros)


def _per_layer(shape):
    zeros = (0,) * len(shape)
    return pl.BlockSpec((None,) + shape, lambda l: (l,) + zeros)


def _encoder_forward(patches, p):
    grid_spec = pltpu.PrefetchScalarGridSpec(
        num_scalar_prefetch=0,
        grid=(LAYERS,),
        in_specs=[
            _resident((B * N_PATCH, PATCH_DIM)),     # patches
            _resident((PATCH_DIM, WIDTH)),           # conv_w
            _resident((1, WIDTH)),                   # class_emb
            _resident((SEQ, WIDTH)),                 # pos_emb
            _resident((1, WIDTH)),                   # ln_pre_g
            _resident((1, WIDTH)),                   # ln_pre_b
            _per_layer((1, WIDTH)),                  # ln1_g
            _per_layer((1, WIDTH)),                  # ln1_b
            _per_layer((WIDTH, 3 * WIDTH)),          # qkv_w
            _per_layer((1, 3 * WIDTH)),              # qkv_b
            _per_layer((WIDTH, WIDTH)),              # attn_w
            _per_layer((1, WIDTH)),                  # attn_b
            _per_layer((1, WIDTH)),                  # ln2_g
            _per_layer((1, WIDTH)),                  # ln2_b
            _per_layer((WIDTH, MLP)),                # fc1_w
            _per_layer((1, MLP)),                    # fc1_b
            _per_layer((MLP, WIDTH)),                # fc2_w
            _per_layer((1, WIDTH)),                  # fc2_b
            _resident((1, WIDTH)),                   # ln_post_g
            _resident((1, WIDTH)),                   # ln_post_b
            _resident((WIDTH, EMBED)),               # vproj
        ],
        out_specs=pl.BlockSpec((B, EMBED), lambda l: (0, 0)),
        scratch_shapes=[pltpu.VMEM((ROWS, WIDTH), jnp.float32)],  # token activations
    )
    return pl.pallas_call(
        _clip_encoder_kernel,
        out_shape=jax.ShapeDtypeStruct((B, EMBED), jnp.float32),
        grid_spec=grid_spec,
        compiler_params=pltpu.CompilerParams(
            dimension_semantics=("arbitrary",),       # activations carried across layers
            vmem_limit_bytes=56 * 1024 * 1024,        # fits v7x's 64 MiB VMEM
        ),
    )(patches,
      p["conv_w"], p["class_emb"], p["pos_emb"], p["ln_pre_g"], p["ln_pre_b"],
      p["ln1_g"], p["ln1_b"], p["qkv_w"], p["qkv_b"], p["attn_w"], p["attn_b"],
      p["ln2_g"], p["ln2_b"], p["fc1_w"], p["fc1_b"], p["fc2_w"], p["fc2_b"],
      p["ln_post_g"], p["ln_post_b"], p["vproj"])


# ------------------------------- model forward -------------------------------
@functools.partial(jax.jit, static_argnames=("return_feature",))
def clip_model_inc_forward(x, params, return_feature=False):
    b, c, h, w = x.shape
    hp, wp = h // PATCH, w // PATCH
    # Conv2d(C, WIDTH, kernel=PATCH, stride=PATCH, bias=False) == patchify + matmul.
    # Whole batch flattened to (B*N_PATCH, C*P*P) so the kernel embeds it in one mm.
    patches = x.reshape(b, c, hp, PATCH, wp, PATCH)
    patches = patches.transpose(0, 2, 4, 1, 3, 5).reshape(b * hp * wp, c * PATCH * PATCH)
    feats = _encoder_forward(patches, params)
    if return_feature:
        return feats                                  # (B, EMBED)
    # mean over 5 Linear(EMBED, 1) heads == matvec with averaged weights/bias (exact),
    # applied in f32 in the wrapper so the kernel output stays lane-dense.
    out = feats @ params["head_w"] + params["head_b"]  # (B, 1)
    return out[:, 0]                                   # (B,)


# ------------------------------ deterministic init ---------------------------
def init_params(key):
    keys = iter(jax.random.split(key, 32))
    bf = jnp.bfloat16

    def nrm(shape, scale=0.02, dtype=jnp.float32):
        return (scale * jax.random.normal(next(keys), shape)).astype(dtype)

    p = {
        # matmul weights stored bf16 (MXU-native); biases / LN params f32
        "conv_w": nrm((PATCH_DIM, WIDTH), dtype=bf),
        "class_emb": nrm((1, WIDTH)),
        "pos_emb": nrm((SEQ, WIDTH)),
        "ln_pre_g": jnp.ones((1, WIDTH), jnp.float32),
        "ln_pre_b": jnp.zeros((1, WIDTH), jnp.float32),
        # per-layer weights stacked on a leading LAYERS axis (streamed by BlockSpec)
        "ln1_g": jnp.ones((LAYERS, 1, WIDTH), jnp.float32),
        "ln1_b": jnp.zeros((LAYERS, 1, WIDTH), jnp.float32),
        "qkv_w": nrm((LAYERS, WIDTH, 3 * WIDTH), dtype=bf),
        "qkv_b": jnp.zeros((LAYERS, 1, 3 * WIDTH), jnp.float32),
        "attn_w": nrm((LAYERS, WIDTH, WIDTH), dtype=bf),
        "attn_b": jnp.zeros((LAYERS, 1, WIDTH), jnp.float32),
        "ln2_g": jnp.ones((LAYERS, 1, WIDTH), jnp.float32),
        "ln2_b": jnp.zeros((LAYERS, 1, WIDTH), jnp.float32),
        "fc1_w": nrm((LAYERS, WIDTH, MLP), dtype=bf),
        "fc1_b": jnp.zeros((LAYERS, 1, MLP), jnp.float32),
        "fc2_w": nrm((LAYERS, MLP, WIDTH), dtype=bf),
        "fc2_b": jnp.zeros((LAYERS, 1, WIDTH), jnp.float32),
        "ln_post_g": jnp.ones((1, WIDTH), jnp.float32),
        "ln_post_b": jnp.zeros((1, WIDTH), jnp.float32),
        "vproj": nrm((WIDTH, EMBED), dtype=bf),
    }
    # 5 x Linear(EMBED, 1) heads folded into one f32 matvec (exact):
    #   mean_i(x @ W_i + b_i) == x @ mean_i(W_i) + mean_i(b_i)
    fc_w = nrm((EMBED, NUM_FC))
    fc_b = nrm((NUM_FC,))
    p["head_w"] = jnp.mean(fc_w, axis=1, keepdims=True)          # (EMBED, 1) f32
    p["head_b"] = jnp.mean(fc_b)                                 # scalar f32
    return p


if __name__ == "__main__":
    key = jax.random.PRNGKey(0)
    pkey, xkey = jax.random.split(key)
    params = init_params(pkey)
    x = jax.random.normal(xkey, (B, C, IMG, IMG), dtype=jnp.float32)

    out = clip_model_inc_forward(x, params)
    jax.block_until_ready(out)
    assert out.shape == (B,), out.shape
    assert out.dtype == jnp.float32

    feats = clip_model_inc_forward(x, params, return_feature=True)
    jax.block_until_ready(feats)
    assert feats.shape == (B, EMBED), feats.shape

    print("KERNEL_OK")
</pallas_src>

<mosaic_0001>
module attributes {stable_mosaic.version = 11 : i64} {
  func.func @_clip_encoder_kernel(%arg0: i32, %arg1: memref<8x192xf32, #tpu.memory_space<vmem>>, %arg2: memref<192x32xbf16, #tpu.memory_space<vmem>>, %arg3: memref<1x32xf32, #tpu.memory_space<vmem>>, %arg4: memref<5x32xf32, #tpu.memory_space<vmem>>, %arg5: memref<1x32xf32, #tpu.memory_space<vmem>>, %arg6: memref<1x32xf32, #tpu.memory_space<vmem>>, %arg7: memref<1x1x32xf32, #tpu.memory_space<vmem>>, %arg8: memref<1x1x32xf32, #tpu.memory_space<vmem>>, %arg9: memref<1x32x96xbf16, #tpu.memory_space<vmem>>, %arg10: memref<1x1x96xf32, #tpu.memory_space<vmem>>, %arg11: memref<1x32x32xbf16, #tpu.memory_space<vmem>>, %arg12: memref<1x1x32xf32, #tpu.memory_space<vmem>>, %arg13: memref<1x1x32xf32, #tpu.memory_space<vmem>>, %arg14: memref<1x1x32xf32, #tpu.memory_space<vmem>>, %arg15: memref<1x32x128xbf16, #tpu.memory_space<vmem>>, %arg16: memref<1x1x128xf32, #tpu.memory_space<vmem>>, %arg17: memref<1x128x32xbf16, #tpu.memory_space<vmem>>, %arg18: memref<1x1x32xf32, #tpu.memory_space<vmem>>, %arg19: memref<1x32xf32, #tpu.memory_space<vmem>>, %arg20: memref<1x32xf32, #tpu.memory_space<vmem>>, %arg21: memref<32x128xbf16, #tpu.memory_space<vmem>>, %arg22: memref<2x128xf32, #tpu.memory_space<vmem>>, %arg23: memref<16x32xf32, #tpu.memory_space<vmem>>) attributes {dimension_semantics = [#tpu.dimension_semantics<arbitrary>], iteration_bounds = array<i64: 2>, scalar_prefetch = 0 : i64, scratch_operands = 1 : i64, tpu.core_type = #tpu.core_type<tc>, window_params = [{pipeline_mode = #tpu.pipeline_mode<synchronous>, transform_indices = @transform_0, window_bounds = array<i64: 8, 192>}, {pipeline_mode = #tpu.pipeline_mode<synchronous>, transform_indices = @transform_1, window_bounds = array<i64: 192, 32>}, {pipeline_mode = #tpu.pipeline_mode<synchronous>, transform_indices = @transform_2, window_bounds = array<i64: 1, 32>}, {pipeline_mode = #tpu.pipeline_mode<synchronous>, transform_indices = @transform_3, window_bounds = array<i64: 5, 32>}, {pipeline_mode = #tpu.pipeline_mode<synchronous>, transform_indices = @transform_4, window_bounds = array<i64: 1, 32>}, {pipeline_mode = #tpu.pipeline_mode<synchronous>, transform_indices = @transform_5, window_bounds = array<i64: 1, 32>}, {transform_indices = @transform_6, window_bounds = array<i64: 1, 1, 32>}, {transform_indices = @transform_7, window_bounds = array<i64: 1, 1, 32>}, {transform_indices = @transform_8, window_bounds = array<i64: 1, 32, 96>}, {transform_indices = @transform_9, window_bounds = array<i64: 1, 1, 96>}, {transform_indices = @transform_10, window_bounds = array<i64: 1, 32, 32>}, {transform_indices = @transform_11, window_bounds = array<i64: 1, 1, 32>}, {transform_indices = @transform_12, window_bounds = array<i64: 1, 1, 32>}, {transform_indices = @transform_13, window_bounds = array<i64: 1, 1, 32>}, {transform_indices = @transform_14, window_bounds = array<i64: 1, 32, 128>}, {transform_indices = @transform_15, window_bounds = array<i64: 1, 1, 128>}, {transform_indices = @transform_16, window_bounds = array<i64: 1, 128, 32>}, {transform_indices = @transform_17, window_bounds = array<i64: 1, 1, 32>}, {pipeline_mode = #tpu.pipeline_mode<synchronous>, transform_indices = @transform_18, window_bounds = array<i64: 1, 32>}, {pipeline_mode = #tpu.pipeline_mode<synchronous>, transform_indices = @transform_19, window_bounds = array<i64: 1, 32>}, {pipeline_mode = #tpu.pipeline_mode<synchronous>, transform_indices = @transform_20, window_bounds = array<i64: 32, 128>}, {pipeline_mode = #tpu.pipeline_mode<synchronous>, transform_indices = @transform_21, window_bounds = array<i64: 2, 128>}]} {
    %c0_i32 = arith.constant 0 : i32
    %0 = arith.cmpi eq, %arg0, %c0_i32 : i32
    %1 = arith.extui %0 : i1 to i32
    %c0_i32_0 = arith.constant 0 : i32
    %2 = arith.cmpi ne, %1, %c0_i32_0 : i32
    scf.if %2 {
      %c0_63 = arith.constant 0 : index
      %c0_64 = arith.constant 0 : index
      %157 = vector.load %arg1[%c0_63, %c0_64] : memref<8x192xf32, #tpu.memory_space<vmem>>, vector<8x192xf32>
      %c0_65 = arith.constant 0 : index
      %c0_66 = arith.constant 0 : index
      %158 = vector.load %arg2[%c0_65, %c0_66] : memref<192x32xbf16, #tpu.memory_space<vmem>>, vector<192x32xbf16>
      %159 = arith.truncf %157 : vector<8x192xf32> to vector<8x192xbf16>
      %cst_67 = arith.constant dense<0.000000e+00> : vector<8x32xf32>
      %160 = tpu.matmul %159, %158, %cst_67 {dimension_numbers = #tpu.dot_dimension_numbers<[1], [0], [0], [1], [0, 0, 1, 1], [], []>} : vector<8x192xbf16>, vector<192x32xbf16>, vector<8x32xf32> -> vector<8x32xf32>
      %c0_68 = arith.constant 0 : index
      %c0_69 = arith.constant 0 : index
      %161 = vector.load %arg3[%c0_68, %c0_69] : memref<1x32xf32, #tpu.memory_space<vmem>>, vector<1x32xf32>
      %c0_70 = arith.constant 0 : index
      %c0_71 = arith.constant 0 : index
      %162 = vector.load %arg4[%c0_70, %c0_71] : memref<5x32xf32, #tpu.memory_space<vmem>>, vector<1x32xf32>
      %163 = arith.addf %161, %162 : vector<1x32xf32>
      %cst_72 = arith.constant 0.000000e+00 : f32
      %164 = vector.broadcast %cst_72 : f32 to vector<3x32xf32>
      %165 = vector.extract_strided_slice %160 {offsets = [0, 0], sizes = [4, 32], strides = [1, 1]} : vector<8x32xf32> to vector<4x32xf32>
      %c1 = arith.constant 1 : index
      %c0_73 = arith.constant 0 : index
      %166 = vector.load %arg4[%c1, %c0_73] : memref<5x32xf32, #tpu.memory_space<vmem>>, vector<4x32xf32>
      %167 = arith.addf %165, %166 : vector<4x32xf32>
      %168 = vector.extract_strided_slice %160 {offsets = [4, 0], sizes = [4, 32], strides = [1, 1]} : vector<8x32xf32> to vector<4x32xf32>
      %c1_74 = arith.constant 1 : index
      %c0_75 = arith.constant 0 : index
      %169 = vector.load %arg4[%c1_74, %c0_75] : memref<5x32xf32, #tpu.memory_space<vmem>>, vector<4x32xf32>
      %170 = arith.addf %168, %169 : vector<4x32xf32>
      %171 = tpu.concatenate %163, %167, %164, %163, %170, %164 in 0 : vector<1x32xf32>, vector<4x32xf32>, vector<3x32xf32>, vector<1x32xf32>, vector<4x32xf32>, vector<3x32xf32> -> vector<16x32xf32>
      %c0_76 = arith.constant 0 : index
      %c0_77 = arith.constant 0 : index
      %172 = vector.load %arg5[%c0_76, %c0_77] : memref<1x32xf32, #tpu.memory_space<vmem>>, vector<1x32xf32>
      %c0_78 = arith.constant 0 : index
      %c0_79 = arith.constant 0 : index
      %173 = vector.load %arg6[%c0_78, %c0_79] : memref<1x32xf32, #tpu.memory_space<vmem>>, vector<1x32xf32>
      %cst_80 = arith.constant dense<0.000000e+00> : vector<16xf32>
      %174 = vector.multi_reduction <add>, %171, %cst_80 [1] : vector<16x32xf32> to vector<16xf32>
      %175 = vector.shape_cast %174 : vector<16xf32> to vector<16x1xf32>
      %cst_81 = arith.constant 3.200000e+01 : f32
      %176 = vector.broadcast %cst_81 : f32 to vector<16x1xf32>
      %177 = arith.divf %175, %176 : vector<16x1xf32>
      %178 = vector.broadcast %177 : vector<16x1xf32> to vector<16x32xf32>
      %179 = arith.subf %171, %178 : vector<16x32xf32>
      %180 = arith.mulf %179, %179 : vector<16x32xf32>
      %cst_82 = arith.constant dense<0.000000e+00> : vector<16xf32>
      %181 = vector.multi_reduction <add>, %180, %cst_82 [1] : vector<16x32xf32> to vector<16xf32>
      %182 = vector.shape_cast %181 : vector<16xf32> to vector<16x1xf32>
      %cst_83 = arith.constant 3.200000e+01 : f32
      %183 = vector.broadcast %cst_83 : f32 to vector<16x1xf32>
      %184 = arith.divf %182, %183 : vector<16x1xf32>
      %185 = vector.broadcast %177 : vector<16x1xf32> to vector<16x32xf32>
      %186 = arith.subf %171, %185 : vector<16x32xf32>
      %cst_84 = arith.constant 9.99999974E-6 : f32
      %187 = vector.broadcast %cst_84 : f32 to vector<16x1xf32>
      %188 = arith.addf %184, %187 : vector<16x1xf32>
      %189 = math.rsqrt %188 : vector<16x1xf32>
      %190 = vector.broadcast %189 : vector<16x1xf32> to vector<16x32xf32>
      %191 = arith.mulf %186, %190 : vector<16x32xf32>
      %192 = vector.broadcast %172 : vector<1x32xf32> to vector<16x32xf32>
      %193 = arith.mulf %191, %192 : vector<16x32xf32>
      %194 = vector.broadcast %173 : vector<1x32xf32> to vector<16x32xf32>
      %195 = arith.addf %193, %194 : vector<16x32xf32>
      %c0_85 = arith.constant 0 : index
      %c0_86 = arith.constant 0 : index
      %196 = vector.load %arg23[%c0_85, %c0_86] : memref<16x32xf32, #tpu.memory_space<vmem>>, vector<16x32xf32>
      tpu.vector_store %arg23[%c0_85, %c0_86], %195 {strides = array<i32>} : memref<16x32xf32, #tpu.memory_space<vmem>>, vector<16x32xf32>,
    } else {
    }
    %c0 = arith.constant 0 : index
    %c0_1 = arith.constant 0 : index
    %3 = vector.load %arg23[%c0, %c0_1] : memref<16x32xf32, #tpu.memory_space<vmem>>, vector<16x32xf32>
    %c0_2 = arith.constant 0 : index
    %c0_3 = arith.constant 0 : index
    %c0_4 = arith.constant 0 : index
    %4 = vector.load %arg7[%c0_2, %c0_3, %c0_4] : memref<1x1x32xf32, #tpu.memory_space<vmem>>, vector<1x1x32xf32>
    %5 = vector.shape_cast %4 : vector<1x1x32xf32> to vector<1x32xf32>
    %c0_5 = arith.constant 0 : index
    %c0_6 = arith.constant 0 : index
    %c0_7 = arith.constant 0 : index
    %6 = vector.load %arg8[%c0_5, %c0_6, %c0_7] : memref<1x1x32xf32, #tpu.memory_space<vmem>>, vector<1x1x32xf32>
    %7 = vector.shape_cast %6 : vector<1x1x32xf32> to vector<1x32xf32>
    %cst = arith.constant dense<0.000000e+00> : vector<16xf32>
    %8 = vector.multi_reduction <add>, %3, %cst [1] : vector<16x32xf32> to vector<16xf32>
    %9 = vector.shape_cast %8 : vector<16xf32> to vector<16x1xf32>
    %cst_8 = arith.constant 3.200000e+01 : f32
    %10 = vector.broadcast %cst_8 : f32 to vector<16x1xf32>
    %11 = arith.divf %9, %10 : vector<16x1xf32>
    %12 = vector.broadcast %11 : vector<16x1xf32> to vector<16x32xf32>
    %13 = arith.subf %3, %12 : vector<16x32xf32>
    %14 = arith.mulf %13, %13 : vector<16x32xf32>
    %cst_9 = arith.constant dense<0.000000e+00> : vector<16xf32>
    %15 = vector.multi_reduction <add>, %14, %cst_9 [1] : vector<16x32xf32> to vector<16xf32>
    %16 = vector.shape_cast %15 : vector<16xf32> to vector<16x1xf32>
    %cst_10 = arith.constant 3.200000e+01 : f32
    %17 = vector.broadcast %cst_10 : f32 to vector<16x1xf32>
    %18 = arith.divf %16, %17 : vector<16x1xf32>
    %19 = vector.broadcast %11 : vector<16x1xf32> to vector<16x32xf32>
    %20 = arith.subf %3, %19 : vector<16x32xf32>
    %cst_11 = arith.constant 9.99999974E-6 : f32
    %21 = vector.broadcast %cst_11 : f32 to vector<16x1xf32>
    %22 = arith.addf %18, %21 : vector<16x1xf32>
    %23 = math.rsqrt %22 : vector<16x1xf32>
    %24 = vector.broadcast %23 : vector<16x1xf32> to vector<16x32xf32>
    %25 = arith.mulf %20, %24 : vector<16x32xf32>
    %26 = vector.broadcast %5 : vector<1x32xf32> to vector<16x32xf32>
    %27 = arith.mulf %25, %26 : vector<16x32xf32>
    %28 = vector.broadcast %7 : vector<1x32xf32> to vector<16x32xf32>
    %29 = arith.addf %27, %28 : vector<16x32xf32>
    %c0_12 = arith.constant 0 : index
    %c0_13 = arith.constant 0 : index
    %c0_14 = arith.constant 0 : index
    %30 = vector.load %arg9[%c0_12, %c0_13, %c0_14] : memref<1x32x96xbf16, #tpu.memory_space<vmem>>, vector<1x32x96xbf16>
    %31 = vector.shape_cast %30 : vector<1x32x96xbf16> to vector<32x96xbf16>
    %32 = arith.truncf %29 : vector<16x32xf32> to vector<16x32xbf16>
    %cst_15 = arith.constant dense<0.000000e+00> : vector<16x96xf32>
    %33 = tpu.matmul %32, %31, %cst_15 {dimension_numbers = #tpu.dot_dimension_numbers<[1], [0], [0], [1], [0, 0, 1, 1], [], []>} : vector<16x32xbf16>, vector<32x96xbf16>, vector<16x96xf32> -> vector<16x96xf32>
    %c0_16 = arith.constant 0 : index
    %c0_17 = arith.constant 0 : index
    %c0_18 = arith.constant 0 : index
    %34 = vector.load %arg10[%c0_16, %c0_17, %c0_18] : memref<1x1x96xf32, #tpu.memory_space<vmem>>, vector<1x1x96xf32>
    %35 = vector.shape_cast %34 : vector<1x1x96xf32> to vector<1x96xf32>
    %36 = vector.broadcast %35 : vector<1x96xf32> to vector<16x96xf32>
    %37 = arith.addf %33, %36 : vector<16x96xf32>
    %38 = vector.extract_strided_slice %37 {offsets = [0, 0], sizes = [16, 32], strides = [1, 1]} : vector<16x96xf32> to vector<16x32xf32>
    %39 = vector.extract_strided_slice %37 {offsets = [0, 32], sizes = [16, 32], strides = [1, 1]} : vector<16x96xf32> to vector<16x32xf32>
    %40 = vector.extract_strided_slice %37 {offsets = [0, 64], sizes = [16, 32], strides = [1, 1]} : vector<16x96xf32> to vector<16x32xf32>
    %41 = vector.extract_strided_slice %38 {offsets = [0, 0], sizes = [16, 8], strides = [1, 1]} : vector<16x32xf32> to vector<16x8xf32>
    %42 = vector.extract_strided_slice %38 {offsets = [0, 8], sizes = [16, 8], strides = [1, 1]} : vector<16x32xf32> to vector<16x8xf32>
    %43 = vector.extract_strided_slice %38 {offsets = [0, 16], sizes = [16, 8], strides = [1, 1]} : vector<16x32xf32> to vector<16x8xf32>
    %44 = vector.extract_strided_slice %38 {offsets = [0, 24], sizes = [16, 8], strides = [1, 1]} : vector<16x32xf32> to vector<16x8xf32>
    %45 = tpu.concatenate %41, %42, %43, %44 in 0 : vector<16x8xf32>, vector<16x8xf32>, vector<16x8xf32>, vector<16x8xf32> -> vector<64x8xf32>
    %46 = arith.truncf %45 : vector<64x8xf32> to vector<64x8xbf16>
    %47 = vector.extract_strided_slice %39 {offsets = [0, 0], sizes = [16, 8], strides = [1, 1]} : vector<16x32xf32> to vector<16x8xf32>
    %48 = vector.extract_strided_slice %39 {offsets = [0, 8], sizes = [16, 8], strides = [1, 1]} : vector<16x32xf32> to vector<16x8xf32>
    %49 = vector.extract_strided_slice %39 {offsets = [0, 16], sizes = [16, 8], strides = [1, 1]} : vector<16x32xf32> to vector<16x8xf32>
    %50 = vector.extract_strided_slice %39 {offsets = [0, 24], sizes = [16, 8], strides = [1, 1]} : vector<16x32xf32> to vector<16x8xf32>
    %51 = tpu.concatenate %47, %48, %49, %50 in 0 : vector<16x8xf32>, vector<16x8xf32>, vector<16x8xf32>, vector<16x8xf32> -> vector<64x8xf32>
    %52 = arith.truncf %51 : vector<64x8xf32> to vector<64x8xbf16>
    %53 = vector.extract_strided_slice %40 {offsets = [0, 0], sizes = [16, 8], strides = [1, 1]} : vector<16x32xf32> to vector<16x8xf32>
    %54 = vector.extract_strided_slice %40 {offsets = [0, 8], sizes = [16, 8], strides = [1, 1]} : vector<16x32xf32> to vector<16x8xf32>
    %55 = vector.extract_strided_slice %40 {offsets = [0, 16], sizes = [16, 8], strides = [1, 1]} : vector<16x32xf32> to vector<16x8xf32>
    %56 = vector.extract_strided_slice %40 {offsets = [0, 24], sizes = [16, 8], strides = [1, 1]} : vector<16x32xf32> to vector<16x8xf32>
    %57 = tpu.concatenate %53, %54, %55, %56 in 0 : vector<16x8xf32>, vector<16x8xf32>, vector<16x8xf32>, vector<16x8xf32> -> vector<64x8xf32>
    %58 = arith.truncf %57 : vector<64x8xf32> to vector<64x8xbf16>
    %cst_19 = arith.constant dense<0.000000e+00> : vector<64x64xf32>
    %59 = tpu.matmul %46, %52, %cst_19 {dimension_numbers = #tpu.dot_dimension_numbers<[1], [1], [0], [0], [0, 0, 1, 0], [], []>} : vector<64x8xbf16>, vector<64x8xbf16>, vector<64x64xf32> -> vector<64x64xf32>
    %cst_20 = arith.constant 0.353553385 : f32
    %60 = vector.broadcast %cst_20 : f32 to vector<64x64xf32>
    %61 = arith.mulf %59, %60 : vector<64x64xf32>
    %62 = tpu.iota {dimensions = array<i32: 0>} : vector<64x64xi32>
    %63 = tpu.iota {dimensions = array<i32: 1>} : vector<64x64xi32>
    %c3_i32 = arith.constant 3 : i32
    %64 = vector.broadcast %c3_i32 : i32 to vector<64x64xi32>
    %65 = arith.shrsi %62, %64 : vector<64x64xi32>
    %c3_i32_21 = arith.constant 3 : i32
    %66 = vector.broadcast %c3_i32_21 : i32 to vector<64x64xi32>
    %67 = arith.shrsi %63, %66 : vector<64x64xi32>
    %68 = arith.cmpi eq, %65, %67 : vector<64x64xi32>
    %c7_i32 = arith.constant 7 : i32
    %69 = vector.broadcast %c7_i32 : i32 to vector<64x64xi32>
    %70 = arith.andi %63, %69 : vector<64x64xi32>
    %c5_i32 = arith.constant 5 : i32
    %71 = vector.broadcast %c5_i32 : i32 to vector<64x64xi32>
    %72 = arith.cmpi slt, %70, %71 : vector<64x64xi32>
    %73 = arith.andi %68, %72 : vector<64x64xi1>
    %cst_22 = arith.constant -1.000000e+30 : f32
    %74 = vector.broadcast %cst_22 : f32 to vector<64x64xf32>
    %75 = arith.select %73, %61, %74 : vector<64x64xi1>, vector<64x64xf32>
    %cst_23 = arith.constant dense<0xFF800000> : vector<64xf32>
    %76 = vector.multi_reduction <maximumf>, %75, %cst_23 [1] : vector<64x64xf32> to vector<64xf32>
    %77 = vector.shape_cast %76 : vector<64xf32> to vector<64x1xf32>
    %78 = vector.broadcast %77 : vector<64x1xf32> to vector<64x64xf32>
    %79 = arith.subf %75, %78 : vector<64x64xf32>
    %80 = math.exp %79 : vector<64x64xf32>
    %cst_24 = arith.constant dense<0.000000e+00> : vector<64xf32>
    %81 = vector.multi_reduction <add>, %80, %cst_24 [1] : vector<64x64xf32> to vector<64xf32>
    %82 = vector.shape_cast %81 : vector<64xf32> to vector<64x1xf32>
    %83 = tpu.reciprocal %82 {approx = true} : vector<64x1xf32> -> vector<64x1xf32>
    %84 = vector.broadcast %83 : vector<64x1xf32> to vector<64x64xf32>
    %85 = arith.mulf %80, %84 : vector<64x64xf32>
    %86 = arith.truncf %85 : vector<64x64xf32> to vector<64x64xbf16>
    %cst_25 = arith.constant dense<0.000000e+00> : vector<64x8xf32>
    %87 = tpu.matmul %86, %58, %cst_25 {dimension_numbers = #tpu.dot_dimension_numbers<[1], [0], [0], [1], [0, 0, 1, 1], [], []>} : vector<64x64xbf16>, vector<64x8xbf16>, vector<64x8xf32> -> vector<64x8xf32>
    %88 = vector.extract_strided_slice %87 {offsets = [0, 0], sizes = [16, 8], strides = [1, 1]} : vector<64x8xf32> to vector<16x8xf32>
    %89 = vector.extract_strided_slice %87 {offsets = [16, 0], sizes = [16, 8], strides = [1, 1]} : vector<64x8xf32> to vector<16x8xf32>
    %90 = vector.extract_strided_slice %87 {offsets = [32, 0], sizes = [16, 8], strides = [1, 1]} : vector<64x8xf32> to vector<16x8xf32>
    %91 = vector.extract_strided_slice %87 {offsets = [48, 0], sizes = [16, 8], strides = [1, 1]} : vector<64x8xf32> to vector<16x8xf32>
    %92 = tpu.concatenate %88, %89, %90, %91 in 1 : vector<16x8xf32>, vector<16x8xf32>, vector<16x8xf32>, vector<16x8xf32> -> vector<16x32xf32>
    %c0_26 = arith.constant 0 : index
    %c0_27 = arith.constant 0 : index
    %c0_28 = arith.constant 0 : index
    %93 = vector.load %arg11[%c0_26, %c0_27, %c0_28] : memref<1x32x32xbf16, #tpu.memory_space<vmem>>, vector<1x32x32xbf16>
    %94 = vector.shape_cast %93 : vector<1x32x32xbf16> to vector<32x32xbf16>
    %95 = arith.truncf %92 : vector<16x32xf32> to vector<16x32xbf16>
    %cst_29 = arith.constant dense<0.000000e+00> : vector<16x32xf32>
    %96 = tpu.matmul %95, %94, %cst_29 {dimension_numbers = #tpu.dot_dimension_numbers<[1], [0], [0], [1], [0, 0, 1, 1], [], []>} : vector<16x32xbf16>, vector<32x32xbf16>, vector<16x32xf32> -> vector<16x32xf32>
    %97 = arith.addf %3, %96 : vector<16x32xf32>
    %c0_30 = arith.constant 0 : index
    %c0_31 = arith.constant 0 : index
    %c0_32 = arith.constant 0 : index
    %98 = vector.load %arg12[%c0_30, %c0_31, %c0_32] : memref<1x1x32xf32, #tpu.memory_space<vmem>>, vector<1x1x32xf32>
    %99 = vector.shape_cast %98 : vector<1x1x32xf32> to vector<1x32xf32>
    %100 = vector.broadcast %99 : vector<1x32xf32> to vector<16x32xf32>
    %101 = arith.addf %97, %100 : vector<16x32xf32>
    %c0_33 = arith.constant 0 : index
    %c0_34 = arith.constant 0 : index
    %c0_35 = arith.constant 0 : index
    %102 = vector.load %arg13[%c0_33, %c0_34, %c0_35] : memref<1x1x32xf32, #tpu.memory_space<vmem>>, vector<1x1x32xf32>
    %103 = vector.shape_cast %102 : vector<1x1x32xf32> to vector<1x32xf32>
    %c0_36 = arith.constant 0 : index
    %c0_37 = arith.constant 0 : index
    %c0_38 = arith.constant 0 : index
    %104 = vector.load %arg14[%c0_36, %c0_37, %c0_38] : memref<1x1x32xf32, #tpu.memory_space<vmem>>, vector<1x1x32xf32>
    %105 = vector.shape_cast %104 : vector<1x1x32xf32> to vector<1x32xf32>
    %cst_39 = arith.constant dense<0.000000e+00> : vector<16xf32>
    %106 = vector.multi_reduction <add>, %101, %cst_39 [1] : vector<16x32xf32> to vector<16xf32>
    %107 = vector.shape_cast %106 : vector<16xf32> to vector<16x1xf32>
    %cst_40 = arith.constant 3.200000e+01 : f32
    %108 = vector.broadcast %cst_40 : f32 to vector<16x1xf32>
    %109 = arith.divf %107, %108 : vector<16x1xf32>
    %110 = vector.broadcast %109 : vector<16x1xf32> to vector<16x32xf32>
    %111 = arith.subf %101, %110 : vector<16x32xf32>
    %112 = arith.mulf %111, %111 : vector<16x32xf32>
    %cst_41 = arith.constant dense<0.000000e+00> : vector<16xf32>
    %113 = vector.multi_reduction <add>, %112, %cst_41 [1] : vector<16x32xf32> to vector<16xf32>
    %114 = vector.shape_cast %113 : vector<16xf32> to vector<16x1xf32>
    %cst_42 = arith.constant 3.200000e+01 : f32
    %115 = vector.broadcast %cst_42 : f32 to vector<16x1xf32>
    %116 = arith.divf %114, %115 : vector<16x1xf32>
    %117 = vector.broadcast %109 : vector<16x1xf32> to vector<16x32xf32>
    %118 = arith.subf %101, %117 : vector<16x32xf32>
    %cst_43 = arith.constant 9.99999974E-6 : f32
    %119 = vector.broadcast %cst_43 : f32 to vector<16x1xf32>
    %120 = arith.addf %116, %119 : vector<16x1xf32>
    %121 = math.rsqrt %120 : vector<16x1xf32>
    %122 = vector.broadcast %121 : vector<16x1xf32> to vector<16x32xf32>
    %123 = arith.mulf %118, %122 : vector<16x32xf32>
    %124 = vector.broadcast %103 : vector<1x32xf32> to vector<16x32xf32>
    %125 = arith.mulf %123, %124 : vector<16x32xf32>
    %126 = vector.broadcast %105 : vector<1x32xf32> to vector<16x32xf32>
    %127 = arith.addf %125, %126 : vector<16x32xf32>
    %c0_44 = arith.constant 0 : index
    %c0_45 = arith.constant 0 : index
    %c0_46 = arith.constant 0 : index
    %128 = vector.load %arg15[%c0_44, %c0_45, %c0_46] : memref<1x32x128xbf16, #tpu.memory_space<vmem>>, vector<1x32x128xbf16>
    %129 = vector.shape_cast %128 : vector<1x32x128xbf16> to vector<32x128xbf16>
    %130 = arith.truncf %127 : vector<16x32xf32> to vector<16x32xbf16>
    %cst_47 = arith.constant dense<0.000000e+00> : vector<16x128xf32>
    %131 = tpu.matmul %130, %129, %cst_47 {dimension_numbers = #tpu.dot_dimension_numbers<[1], [0], [0], [1], [0, 0, 1, 1], [], []>} : vector<16x32xbf16>, vector<32x128xbf16>, vector<16x128xf32> -> vector<16x128xf32>
    %c0_48 = arith.constant 0 : index
    %c0_49 = arith.constant 0 : index
    %c0_50 = arith.constant 0 : index
    %132 = vector.load %arg16[%c0_48, %c0_49, %c0_50] : memref<1x1x128xf32, #tpu.memory_space<vmem>>, vector<1x1x128xf32>
    %133 = vector.shape_cast %132 : vector<1x1x128xf32> to vector<1x128xf32>
    %134 = vector.broadcast %133 : vector<1x128xf32> to vector<16x128xf32>
    %135 = arith.addf %131, %134 : vector<16x128xf32>
    %cst_51 = arith.constant 1.702000e+00 : f32
    %136 = vector.broadcast %cst_51 : f32 to vector<16x128xf32>
    %137 = arith.mulf %136, %135 : vector<16x128xf32>
    %138 = arith.negf %137 : vector<16x128xf32>
    %139 = math.exp %138 : vector<16x128xf32>
    %cst_52 = arith.constant 1.000000e+00 : f32
    %140 = vector.broadcast %cst_52 : f32 to vector<16x128xf32>
    %141 = arith.addf %140, %139 : vector<16x128xf32>
    %142 = arith.divf %140, %141 : vector<16x128xf32>
    %143 = arith.mulf %135, %142 : vector<16x128xf32>
    %c0_53 = arith.constant 0 : index
    %c0_54 = arith.constant 0 : index
    %c0_55 = arith.constant 0 : index
    %144 = vector.load %arg17[%c0_53, %c0_54, %c0_55] : memref<1x128x32xbf16, #tpu.memory_space<vmem>>, vector<1x128x32xbf16>
    %145 = vector.shape_cast %144 : vector<1x128x32xbf16> to vector<128x32xbf16>
    %146 = arith.truncf %143 : vector<16x128xf32> to vector<16x128xbf16>
    %cst_56 = arith.constant dense<0.000000e+00> : vector<16x32xf32>
    %147 = tpu.matmul %146, %145, %cst_56 {dimension_numbers = #tpu.dot_dimension_numbers<[1], [0], [0], [1], [0, 0, 1, 1], [], []>} : vector<16x128xbf16>, vector<128x32xbf16>, vector<16x32xf32> -> vector<16x32xf32>
    %148 = arith.addf %101, %147 : vector<16x32xf32>
    %c0_57 = arith.constant 0 : index
    %c0_58 = arith.constant 0 : index
    %c0_59 = arith.constant 0 : index
    %149 = vector.load %arg18[%c0_57, %c0_58, %c0_59] : memref<1x1x32xf32, #tpu.memory_space<vmem>>, vector<1x1x32xf32>
    %150 = vector.shape_cast %149 : vector<1x1x32xf32> to vector<1x32xf32>
    %151 = vector.broadcast %150 : vector<1x32xf32> to vector<16x32xf32>
    %152 = arith.addf %148, %151 : vector<16x32xf32>
    %c0_60 = arith.constant 0 : index
    %c0_61 = arith.constant 0 : index
    %153 = vector.load %arg23[%c0_60, %c0_61] : memref<16x32xf32, #tpu.memory_space<vmem>>, vector<16x32xf32>
    tpu.vector_store %arg23[%c0_60, %c0_61], %152 {strides = array<i32>} : memref<16x32xf32, #tpu.memory_space<vmem>>, vector<16x32xf32>,
    %c1_i32 = arith.constant 1 : i32
    %154 = arith.cmpi eq, %arg0, %c1_i32 : i32
    %155 = arith.extui %154 : i1 to i32
    %c0_i32_62 = arith.constant 0 : i32
    %156 = arith.cmpi ne, %155, %c0_i32_62 : i32
    scf.if %156 {
      %157 = vector.extract_strided_slice %152 {offsets = [0, 0], sizes = [1, 32], strides = [1, 1]} : vector<16x32xf32> to vector<1x32xf32>
      %158 = vector.extract_strided_slice %152 {offsets = [8, 0], sizes = [1, 32], strides = [1, 1]} : vector<16x32xf32> to vector<1x32xf32>
      %159 = tpu.concatenate %157, %158 in 0 : vector<1x32xf32>, vector<1x32xf32> -> vector<2x32xf32>
      %c0_63 = arith.constant 0 : index
      %c0_64 = arith.constant 0 : index
      %160 = vector.load %arg19[%c0_63, %c0_64] : memref<1x32xf32, #tpu.memory_space<vmem>>, vector<1x32xf32>
      %c0_65 = arith.constant 0 : index
      %c0_66 = arith.constant 0 : index
      %161 = vector.load %arg20[%c0_65, %c0_66] : memref<1x32xf32, #tpu.memory_space<vmem>>, vector<1x32xf32>
      %cst_67 = arith.constant dense<0.000000e+00> : vector<2xf32>
      %162 = vector.multi_reduction <add>, %159, %cst_67 [1] : vector<2x32xf32> to vector<2xf32>
      %163 = vector.shape_cast %162 : vector<2xf32> to vector<2x1xf32>
      %cst_68 = arith.constant 3.200000e+01 : f32
      %164 = vector.broadcast %cst_68 : f32 to vector<2x1xf32>
      %165 = arith.divf %163, %164 : vector<2x1xf32>
      %166 = vector.broadcast %165 : vector<2x1xf32> to vector<2x32xf32>
      %167 = arith.subf %159, %166 : vector<2x32xf32>
      %168 = arith.mulf %167, %167 : vector<2x32xf32>
      %cst_69 = arith.constant dense<0.000000e+00> : vector<2xf32>
      %169 = vector.multi_reduction <add>, %168, %cst_69 [1] : vector<2x32xf32> to vector<2xf32>
      %170 = vector.shape_cast %169 : vector<2xf32> to vector<2x1xf32>
      %cst_70 = arith.constant 3.200000e+01 : f32
      %171 = vector.broadcast %cst_70 : f32 to vector<2x1xf32>
      %172 = arith.divf %170, %171 : vector<2x1xf32>
      %173 = vector.broadcast %165 : vector<2x1xf32> to vector<2x32xf32>
      %174 = arith.subf %159, %173 : vector<2x32xf32>
      %cst_71 = arith.constant 9.99999974E-6 : f32
      %175 = vector.broadcast %cst_71 : f32 to vector<2x1xf32>
      %176 = arith.addf %172, %175 : vector<2x1xf32>
      %177 = math.rsqrt %176 : vector<2x1xf32>
      %178 = vector.broadcast %177 : vector<2x1xf32> to vector<2x32xf32>
      %179 = arith.mulf %174, %178 : vector<2x32xf32>
      %180 = vector.broadcast %160 : vector<1x32xf32> to vector<2x32xf32>
      %181 = arith.mulf %179, %180 : vector<2x32xf32>
      %182 = vector.broadcast %161 : vector<1x32xf32> to vector<2x32xf32>
      %183 = arith.addf %181, %182 : vector<2x32xf32>
      %c0_72 = arith.constant 0 : index
      %c0_73 = arith.constant 0 : index
      %184 = vector.load %arg21[%c0_72, %c0_73] : memref<32x128xbf16, #tpu.memory_space<vmem>>, vector<32x128xbf16>
      %185 = arith.truncf %183 : vector<2x32xf32> to vector<2x32xbf16>
      %cst_74 = arith.constant dense<0.000000e+00> : vector<2x128xf32>
      %186 = tpu.matmul %185, %184, %cst_74 {dimension_numbers = #tpu.dot_dimension_numbers<[1], [0], [0], [1], [0, 0, 1, 1], [], []>} : vector<2x32xbf16>, vector<32x128xbf16>, vector<2x128xf32> -> vector<2x128xf32>
      %c0_75 = arith.constant 0 : index
      %c0_76 = arith.constant 0 : index
      %187 = vector.load %arg22[%c0_75, %c0_76] : memref<2x128xf32, #tpu.memory_space<vmem>>, vector<2x128xf32>
      tpu.vector_store %arg22[%c0_75, %c0_76], %186 {strides = array<i32>} : memref<2x128xf32, #tpu.memory_space<vmem>>, vector<2x128xf32>,
    } else {
    }
    return
  }
  func.func @transform_0(%arg0: i32) -> (i32, i32) {
    %c0_i32 = arith.constant 0 : i32
    %c0_i32_0 = arith.constant 0 : i32
    %c0_i32_1 = arith.constant 0 : i32
    return %c0_i32, %c0_i32_0 : i32, i32
  }
  func.func @transform_1(%arg0: i32) -> (i32, i32) {
    %c0_i32 = arith.constant 0 : i32
    %c0_i32_0 = arith.constant 0 : i32
    %c0_i32_1 = arith.constant 0 : i32
    return %c0_i32, %c0_i32_0 : i32, i32
  }
  func.func @transform_2(%arg0: i32) -> (i32, i32) {
    %c0_i32 = arith.constant 0 : i32
    %c0_i32_0 = arith.constant 0 : i32
    %c0_i32_1 = arith.constant 0 : i32
    return %c0_i32, %c0_i32_0 : i32, i32
  }
  func.func @transform_3(%arg0: i32) -> (i32, i32) {
    %c0_i32 = arith.constant 0 : i32
    %c0_i32_0 = arith.constant 0 : i32
    %c0_i32_1 = arith.constant 0 : i32
    return %c0_i32, %c0_i32_0 : i32, i32
  }
  func.func @transform_4(%arg0: i32) -> (i32, i32) {
    %c0_i32 = arith.constant 0 : i32
    %c0_i32_0 = arith.constant 0 : i32
    %c0_i32_1 = arith.constant 0 : i32
    return %c0_i32, %c0_i32_0 : i32, i32
  }
  func.func @transform_5(%arg0: i32) -> (i32, i32) {
    %c0_i32 = arith.constant 0 : i32
    %c0_i32_0 = arith.constant 0 : i32
    %c0_i32_1 = arith.constant 0 : i32
    return %c0_i32, %c0_i32_0 : i32, i32
  }
  func.func @transform_6(%arg0: i32) -> (i32, i32, i32) {
    %c0_i32 = arith.constant 0 : i32
    %c0_i32_0 = arith.constant 0 : i32
    %c0_i32_1 = arith.constant 0 : i32
    return %arg0, %c0_i32, %c0_i32_0 : i32, i32, i32
  }
  func.func @transform_7(%arg0: i32) -> (i32, i32, i32) {
    %c0_i32 = arith.constant 0 : i32
    %c0_i32_0 = arith.constant 0 : i32
    %c0_i32_1 = arith.constant 0 : i32
    return %arg0, %c0_i32, %c0_i32_0 : i32, i32, i32
  }
  func.func @transform_8(%arg0: i32) -> (i32, i32, i32) {
    %c0_i32 = arith.constant 0 : i32
    %c0_i32_0 = arith.constant 0 : i32
    %c0_i32_1 = arith.constant 0 : i32
    return %arg0, %c0_i32, %c0_i32_0 : i32, i32, i32
  }
  func.func @transform_9(%arg0: i32) -> (i32, i32, i32) {
    %c0_i32 = arith.constant 0 : i32
    %c0_i32_0 = arith.constant 0 : i32
    %c0_i32_1 = arith.constant 0 : i32
    return %arg0, %c0_i32, %c0_i32_0 : i32, i32, i32
  }
  func.func @transform_10(%arg0: i32) -> (i32, i32, i32) {
    %c0_i32 = arith.constant 0 : i32
    %c0_i32_0 = arith.constant 0 : i32
    %c0_i32_1 = arith.constant 0 : i32
    return %arg0, %c0_i32, %c0_i32_0 : i32, i32, i32
  }
  func.func @transform_11(%arg0: i32) -> (i32, i32, i32) {
    %c0_i32 = arith.constant 0 : i32
    %c0_i32_0 = arith.constant 0 : i32
    %c0_i32_1 = arith.constant 0 : i32
    return %arg0, %c0_i32, %c0_i32_0 : i32, i32, i32
  }
  func.func @transform_12(%arg0: i32) -> (i32, i32, i32) {
    %c0_i32 = arith.constant 0 : i32
    %c0_i32_0 = arith.constant 0 : i32
    %c0_i32_1 = arith.constant 0 : i32
    return %arg0, %c0_i32, %c0_i32_0 : i32, i32, i32
  }
  func.func @transform_13(%arg0: i32) -> (i32, i32, i32) {
    %c0_i32 = arith.constant 0 : i32
    %c0_i32_0 = arith.constant 0 : i32
    %c0_i32_1 = arith.constant 0 : i32
    return %arg0, %c0_i32, %c0_i32_0 : i32, i32, i32
  }
  func.func @transform_14(%arg0: i32) -> (i32, i32, i32) {
    %c0_i32 = arith.constant 0 : i32
    %c0_i32_0 = arith.constant 0 : i32
    %c0_i32_1 = arith.constant 0 : i32
    return %arg0, %c0_i32, %c0_i32_0 : i32, i32, i32
  }
  func.func @transform_15(%arg0: i32) -> (i32, i32, i32) {
    %c0_i32 = arith.constant 0 : i32
    %c0_i32_0 = arith.constant 0 : i32
    %c0_i32_1 = arith.constant 0 : i32
    return %arg0, %c0_i32, %c0_i32_0 : i32, i32, i32
  }
  func.func @transform_16(%arg0: i32) -> (i32, i32, i32) {
    %c0_i32 = arith.constant 0 : i32
    %c0_i32_0 = arith.constant 0 : i32
    %c0_i32_1 = arith.constant 0 : i32
    return %arg0, %c0_i32, %c0_i32_0 : i32, i32, i32
  }
  func.func @transform_17(%arg0: i32) -> (i32, i32, i32) {
    %c0_i32 = arith.constant 0 : i32
    %c0_i32_0 = arith.constant 0 : i32
    %c0_i32_1 = arith.constant 0 : i32
    return %arg0, %c0_i32, %c0_i32_0 : i32, i32, i32
  }
  func.func @transform_18(%arg0: i32) -> (i32, i32) {
    %c0_i32 = arith.constant 0 : i32
    %c0_i32_0 = arith.constant 0 : i32
    %c0_i32_1 = arith.constant 0 : i32
    return %c0_i32, %c0_i32_0 : i32, i32
  }
  func.func @transform_19(%arg0: i32) -> (i32, i32) {
    %c0_i32 = arith.constant 0 : i32
    %c0_i32_0 = arith.constant 0 : i32
    %c0_i32_1 = arith.constant 0 : i32
    return %c0_i32, %c0_i32_0 : i32, i32
  }
  func.func @transform_20(%arg0: i32) -> (i32, i32) {
    %c0_i32 = arith.constant 0 : i32
    %c0_i32_0 = arith.constant 0 : i32
    %c0_i32_1 = arith.constant 0 : i32
    return %c0_i32, %c0_i32_0 : i32, i32
  }
  func.func @transform_21(%arg0: i32) -> (i32, i32) {
    %c0_i32 = arith.constant 0 : i32
    %c0_i32_0 = arith.constant 0 : i32
    %c0_i32_1 = arith.constant 0 : i32
    return %c0_i32, %c0_i32_0 : i32, i32
  }
}

</mosaic_0001>

<llo_original>
// kernel: clip_model_inc_forward.1
$region0: #{clip_model_inc_forward.1}
  #allocation0 [shape = 'u32[]', space=smem, size = 0x4, offset = 0x4, fixed_abs, tag = 'smem constant byte address 0x4 - core index']
  #allocation1 [shape = 'u32[144,128]{1,0:T(1,128)}', space=vmem, size = 0x12000, scoped, tag = 'internal scratch']
  #allocation2 [shape = 'f32[16,32]{1,0:T(8,128)}', space=vmem, size = 0x2000, scoped, tag = 'scratch operand']
  %s0 = inlined_call_operand.vmem [shape: f32[8,192], index: 0, kind: input, shape index: {}]
  %s1 = inlined_call_operand.vmem [shape: bf16[192,32], index: 1, kind: input, shape index: {}]
  %s2 = inlined_call_operand.vmem [shape: f32[1,32], index: 2, kind: input, shape index: {}]
  %s3 = inlined_call_operand.vmem [shape: f32[5,32], index: 3, kind: input, shape index: {}]
  %s4 = inlined_call_operand.vmem [shape: f32[1,32], index: 4, kind: input, shape index: {}]
  %s5 = inlined_call_operand.vmem [shape: f32[1,32], index: 5, kind: input, shape index: {}]
  %s6 = inlined_call_operand.vmem [shape: f32[2,1,32], index: 6, kind: input, shape index: {}]
  %s7 = inlined_call_operand.vmem [shape: f32[2,1,32], index: 7, kind: input, shape index: {}]
  %s8 = inlined_call_operand.vmem [shape: bf16[2,32,96], index: 8, kind: input, shape index: {}]
  %s9 = inlined_call_operand.vmem [shape: f32[2,1,96], index: 9, kind: input, shape index: {}]
  %s10 = inlined_call_operand.vmem [shape: bf16[2,32,32], index: 10, kind: input, shape index: {}]
  %s11 = inlined_call_operand.vmem [shape: f32[2,1,32], index: 11, kind: input, shape index: {}]
  %s12 = inlined_call_operand.vmem [shape: f32[2,1,32], index: 12, kind: input, shape index: {}]
  %s13 = inlined_call_operand.vmem [shape: f32[2,1,32], index: 13, kind: input, shape index: {}]
  %s14 = inlined_call_operand.vmem [shape: bf16[2,32,128], index: 14, kind: input, shape index: {}]
  %s15 = inlined_call_operand.vmem [shape: f32[2,1,128], index: 15, kind: input, shape index: {}]
  %s16 = inlined_call_operand.vmem [shape: bf16[2,128,32], index: 16, kind: input, shape index: {}]
  %s17 = inlined_call_operand.vmem [shape: f32[2,1,32], index: 17, kind: input, shape index: {}]
  %s18 = inlined_call_operand.vmem [shape: f32[1,32], index: 18, kind: input, shape index: {}]
  %s19 = inlined_call_operand.vmem [shape: f32[1,32], index: 19, kind: input, shape index: {}]
  %s20 = inlined_call_operand.vmem [shape: bf16[32,128], index: 20, kind: input, shape index: {}]
  %s21 = inlined_call_operand.vmem [shape: f32[2,128], index: 21, kind: output, shape index: {}]
  %s22 = sld [smem:[#allocation0]]
  $region125: #{clip_model_inc_forward.1} parent=0
    _
  %s24 = ssub.s32 1, %s22
  %s25 = scalar_select 0, %s24, %s22
  loop: start=0, step=1, limit=4
  $region2: #{clip_model_inc_forward.1} parent=0 // loop_pre_header
    _
  $region3: #{clip_model_inc_forward.1} parent=0 // loop_header
    %s27 = sphi 0, %s31
    %p28 = scmp.ge.s32.totalorder %s27, 4
    %s35 = sphi 0, %s35
    %s37 = sphi 0, %s35
    %s38 = sphi 0, %s37
    %s52 = sphi 0, %s38
    %s56 = sphi 0, %s56
    %s58 = sphi 0, %s56
    %s59 = sphi 0, %s58
    %s73 = sphi 0, %s59
    %s77 = sphi 0, %s77
    %s79 = sphi 0, %s77
    %s80 = sphi 0, %s79
    %s94 = sphi 0, %s80
    %s98 = sphi 0, %s98
    %s100 = sphi 0, %s98
    %s101 = sphi 0, %s100
    %s115 = sphi 0, %s101
    %s119 = sphi 0, %s119
    %s121 = sphi 0, %s119
    %s122 = sphi 0, %s121
    %s136 = sphi 0, %s122
    %s140 = sphi 0, %s140
    %s142 = sphi 0, %s140
    %s143 = sphi 0, %s142
    %s157 = sphi 0, %s143
    %s163 = sphi 0, %s165
    %s166 = sphi 0, %s163
    %s167 = sphi 0, %s166
    %s183 = sphi 0, %s167
    %s189 = sphi 0, %s191
    %s192 = sphi 0, %s189
    %s193 = sphi 0, %s192
    %s209 = sphi 0, %s193
    %s215 = sphi 0, %s217
    %s218 = sphi 0, %s215
    %s219 = sphi 0, %s218
    %s235 = sphi 0, %s219
    %s241 = sphi 0, %s243
    %s244 = sphi 0, %s241
    %s245 = sphi 0, %s244
    %s261 = sphi 0, %s245
    %s267 = sphi 0, %s269
    %s270 = sphi 0, %s267
    %s271 = sphi 0, %s270
    %s287 = sphi 0, %s271
    %s293 = sphi 0, %s295
    %s296 = sphi 0, %s293
    %s297 = sphi 0, %s296
    %s313 = sphi 0, %s297
    %s319 = sphi 0, %s321
    %s322 = sphi 0, %s319
    %s323 = sphi 0, %s322
    %s339 = sphi 0, %s323
    %s345 = sphi 0, %s347
    %s348 = sphi 0, %s345
    %s349 = sphi 0, %s348
    %s365 = sphi 0, %s349
    %s371 = sphi 0, %s373
    %s374 = sphi 0, %s371
    %s375 = sphi 0, %s374
    %s391 = sphi 0, %s375
    %s397 = sphi 0, %s399
    %s400 = sphi 0, %s397
    %s401 = sphi 0, %s400
    %s417 = sphi 0, %s401
    %s423 = sphi 0, %s425
    %s426 = sphi 0, %s423
    %s427 = sphi 0, %s426
    %s443 = sphi 0, %s427
    %s449 = sphi 0, %s451
    %s452 = sphi 0, %s449
    %s453 = sphi 0, %s452
    %s469 = sphi 0, %s453
    %s473 = sphi 0, %s473
    %s475 = sphi 0, %s473
    %s476 = sphi 0, %s475
    %s490 = sphi 0, %s476
    %s494 = sphi 0, %s494
    %s496 = sphi 0, %s494
    %s497 = sphi 0, %s496
    %s511 = sphi 0, %s497
    %s515 = sphi 0, %s515
    %s517 = sphi 0, %s515
    %s518 = sphi 0, %s517
    %s532 = sphi 0, %s518
    %s536 = sphi 0, %s536
    %s538 = sphi 0, %s536
    %s539 = sphi 0, %s538
    %s553 = sphi 0, %s539
  $region4: #{clip_model_inc_forward.1} parent=0 // loop_header_branch
    %30 = sbr.rel (%p28) target = $region8
  $region5: #{clip_model_inc_forward.1} parent=0 // loop_body
    %s32 = ssub.s32 %s27, 1
    %s33 = ssub.s32 %s27, 2
    %s34 = sadd.s32 %s27, 1
    %s36 = sadd.s32 %s35, 1
    %p39 = scmp.eq.s32.totalorder %s27, 1
    %p40 = scmp.ne.s32.totalorder %s35, %s37
    %p41 = scmp.eq.s32.totalorder %s27, 0
    %p42 = por %p40, %p41
    %p43 = scmp.ne.s32.totalorder %s35, %s37
    %p44 = scmp.eq.s32.totalorder %s32, 1
    %p45 = por %p43, %p44
    %p46 = scmp.ne.s32.totalorder %s37, %s38
    %p47 = scmp.eq.s32.totalorder %s32, 0
    %p48 = por %p46, %p47
    %p49 = scmp.ne.s32.totalorder %s37, %s38
    %p50 = scmp.eq.s32.totalorder %s33, 1
    %p51 = por %p49, %p50
    %p53 = scmp.ne.s32.totalorder %s38, %s52
    %p54 = scmp.eq.s32.totalorder %s33, 0
    %p55 = por %p53, %p54
    %s57 = sadd.s32 %s56, 1
    %p60 = scmp.eq.s32.totalorder %s27, 1
    %p61 = scmp.ne.s32.totalorder %s56, %s58
    %p62 = scmp.eq.s32.totalorder %s27, 0
    %p63 = por %p61, %p62
    %p64 = scmp.ne.s32.totalorder %s56, %s58
    %p65 = scmp.eq.s32.totalorder %s32, 1
    %p66 = por %p64, %p65
    %p67 = scmp.ne.s32.totalorder %s58, %s59
    %p68 = scmp.eq.s32.totalorder %s32, 0
    %p69 = por %p67, %p68
    %p70 = scmp.ne.s32.totalorder %s58, %s59
    %p71 = scmp.eq.s32.totalorder %s33, 1
    %p72 = por %p70, %p71
    %p74 = scmp.ne.s32.totalorder %s59, %s73
    %p75 = scmp.eq.s32.totalorder %s33, 0
    %p76 = por %p74, %p75
    %s78 = sadd.s32 %s77, 1
    %p81 = scmp.eq.s32.totalorder %s27, 1
    %p82 = scmp.ne.s32.totalorder %s77, %s79
    %p83 = scmp.eq.s32.totalorder %s27, 0
    %p84 = por %p82, %p83
    %p85 = scmp.ne.s32.totalorder %s77, %s79
    %p86 = scmp.eq.s32.totalorder %s32, 1
    %p87 = por %p85, %p86
    %p88 = scmp.ne.s32.totalorder %s79, %s80
    %p89 = scmp.eq.s32.totalorder %s32, 0
    %p90 = por %p88, %p89
    %p91 = scmp.ne.s32.totalorder %s79, %s80
    %p92 = scmp.eq.s32.totalorder %s33, 1
    %p93 = por %p91, %p92
    %p95 = scmp.ne.s32.totalorder %s80, %s94
    %p96 = scmp.eq.s32.totalorder %s33, 0
    %p97 = por %p95, %p96
    %s99 = sadd.s32 %s98, 1
    %p102 = scmp.eq.s32.totalorder %s27, 1
    %p103 = scmp.ne.s32.totalorder %s98, %s100
    %p104 = scmp.eq.s32.totalorder %s27, 0
    %p105 = por %p103, %p104
    %p106 = scmp.ne.s32.totalorder %s98, %s100
    %p107 = scmp.eq.s32.totalorder %s32, 1
    %p108 = por %p106, %p107
    %p109 = scmp.ne.s32.totalorder %s100, %s101
    %p110 = scmp.eq.s32.totalorder %s32, 0
    %p111 = por %p109, %p110
    %p112 = scmp.ne.s32.totalorder %s100, %s101
    %p113 = scmp.eq.s32.totalorder %s33, 1
    %p114 = por %p112, %p113
    %p116 = scmp.ne.s32.totalorder %s101, %s115
    %p117 = scmp.eq.s32.totalorder %s33, 0
    %p118 = por %p116, %p117
    %s120 = sadd.s32 %s119, 1
    %p123 = scmp.eq.s32.totalorder %s27, 1
    %p124 = scmp.ne.s32.totalorder %s119, %s121
    %p125 = scmp.eq.s32.totalorder %s27, 0
    %p126 = por %p124, %p125
    %p127 = scmp.ne.s32.totalorder %s119, %s121
    %p128 = scmp.eq.s32.totalorder %s32, 1
    %p129 = por %p127, %p128
    %p130 = scmp.ne.s32.totalorder %s121, %s122
    %p131 = scmp.eq.s32.totalorder %s32, 0
    %p132 = por %p130, %p131
    %p133 = scmp.ne.s32.totalorder %s121, %s122
    %p134 = scmp.eq.s32.totalorder %s33, 1
    %p135 = por %p133, %p134
    %p137 = scmp.ne.s32.totalorder %s122, %s136
    %p138 = scmp.eq.s32.totalorder %s33, 0
    %p139 = por %p137, %p138
    %s141 = sadd.s32 %s140, 1
    %p144 = scmp.eq.s32.totalorder %s27, 1
    %p145 = scmp.ne.s32.totalorder %s140, %s142
    %p146 = scmp.eq.s32.totalorder %s27, 0
    %p147 = por %p145, %p146
    %p148 = scmp.ne.s32.totalorder %s140, %s142
    %p149 = scmp.eq.s32.totalorder %s32, 1
    %p150 = por %p148, %p149
    %p151 = scmp.ne.s32.totalorder %s142, %s143
    %p152 = scmp.eq.s32.totalorder %s32, 0
    %p153 = por %p151, %p152
    %p154 = scmp.ne.s32.totalorder %s142, %s143
    %p155 = scmp.eq.s32.totalorder %s33, 1
    %p156 = por %p154, %p155
    %p158 = scmp.ne.s32.totalorder %s143, %s157
    %p159 = scmp.eq.s32.totalorder %s33, 0
    %p160 = por %p158, %p159
    %s161 = ssub.s32 %s27, %s34
    %p162 = scmp.eq.s32.totalorder %s161, 0
    %s164 = sadd.s32 %s163, 1
    %s165 = scalar_select %p162, %s163, %s164
    %p168 = pneg %p162
    %p169 = scmp.eq.s32.totalorder %s27, 1
    %p170 = por %p168, %p169
    %p171 = scmp.ne.s32.totalorder %s163, %s166
    %p172 = scmp.eq.s32.totalorder %s27, 0
    %p173 = por %p171, %p172
    %p174 = scmp.ne.s32.totalorder %s163, %s166
    %p175 = scmp.eq.s32.totalorder %s32, 1
    %p176 = por %p174, %p175
    %p177 = scmp.ne.s32.totalorder %s166, %s167
    %p178 = scmp.eq.s32.totalorder %s32, 0
    %p179 = por %p177, %p178
    %p180 = scmp.ne.s32.totalorder %s166, %s167
    %p181 = scmp.eq.s32.totalorder %s33, 1
    %p182 = por %p180, %p181
    %p184 = scmp.ne.s32.totalorder %s167, %s183
    %p185 = scmp.eq.s32.totalorder %s33, 0
    %p186 = por %p184, %p185
    %s187 = ssub.s32 %s27, %s34
    %p188 = scmp.eq.s32.totalorder %s187, 0
    %s190 = sadd.s32 %s189, 1
    %s191 = scalar_select %p188, %s189, %s190
    %p194 = pneg %p188
    %p195 = scmp.eq.s32.totalorder %s27, 1
    %p196 = por %p194, %p195
    %p197 = scmp.ne.s32.totalorder %s189, %s192
    %p198 = scmp.eq.s32.totalorder %s27, 0
    %p199 = por %p197, %p198
    %p200 = scmp.ne.s32.totalorder %s189, %s192
    %p201 = scmp.eq.s32.totalorder %s32, 1
    %p202 = por %p200, %p201
    %p203 = scmp.ne.s32.totalorder %s192, %s193
    %p204 = scmp.eq.s32.totalorder %s32, 0
    %p205 = por %p203, %p204
    %p206 = scmp.ne.s32.totalorder %s192, %s193
    %p207 = scmp.eq.s32.totalorder %s33, 1
    %p208 = por %p206, %p207
    %p210 = scmp.ne.s32.totalorder %s193, %s209
    %p211 = scmp.eq.s32.totalorder %s33, 0
    %p212 = por %p210, %p211
    %s213 = ssub.s32 %s27, %s34
    %p214 = scmp.eq.s32.totalorder %s213, 0
    %s216 = sadd.s32 %s215, 1
    %s217 = scalar_select %p214, %s215, %s216
    %p220 = pneg %p214
    %p221 = scmp.eq.s32.totalorder %s27, 1
    %p222 = por %p220, %p221
    %p223 = scmp.ne.s32.totalorder %s215, %s218
    %p224 = scmp.eq.s32.totalorder %s27, 0
    %p225 = por %p223, %p224
    %p226 = scmp.ne.s32.totalorder %s215, %s218
    %p227 = scmp.eq.s32.totalorder %s32, 1
    %p228 = por %p226, %p227
    %p229 = scmp.ne.s32.totalorder %s218, %s219
    %p230 = scmp.eq.s32.totalorder %s32, 0
    %p231 = por %p229, %p230
    %p232 = scmp.ne.s32.totalorder %s218, %s219
    %p233 = scmp.eq.s32.totalorder %s33, 1
    %p234 = por %p232, %p233
    %p236 = scmp.ne.s32.totalorder %s219, %s235
    %p237 = scmp.eq.s32.totalorder %s33, 0
    %p238 = por %p236, %p237
    %s239 = ssub.s32 %s27, %s34
    %p240 = scmp.eq.s32.totalorder %s239, 0
    %s242 = sadd.s32 %s241, 1
    %s243 = scalar_select %p240, %s241, %s242
    %p246 = pneg %p240
    %p247 = scmp.eq.s32.totalorder %s27, 1
    %p248 = por %p246, %p247
    %p249 = scmp.ne.s32.totalorder %s241, %s244
    %p250 = scmp.eq.s32.totalorder %s27, 0
    %p251 = por %p249, %p250
    %p252 = scmp.ne.s32.totalorder %s241, %s244
    %p253 = scmp.eq.s32.totalorder %s32, 1
    %p254 = por %p252, %p253
    %p255 = scmp.ne.s32.totalorder %s244, %s245
    %p256 = scmp.eq.s32.totalorder %s32, 0
    %p257 = por %p255, %p256
    %p258 = scmp.ne.s32.totalorder %s244, %s245
    %p259 = scmp.eq.s32.totalorder %s33, 1
    %p260 = por %p258, %p259
    %p262 = scmp.ne.s32.totalorder %s245, %s261
    %p263 = scmp.eq.s32.totalorder %s33, 0
    %p264 = por %p262, %p263
    %s265 = ssub.s32 %s27, %s34
    %p266 = scmp.eq.s32.totalorder %s265, 0
    %s268 = sadd.s32 %s267, 1
    %s269 = scalar_select %p266, %s267, %s268
    %p272 = pneg %p266
    %p273 = scmp.eq.s32.totalorder %s27, 1
    %p274 = por %p272, %p273
    %p275 = scmp.ne.s32.totalorder %s267, %s270
    %p276 = scmp.eq.s32.totalorder %s27, 0
    %p277 = por %p275, %p276
    %p278 = scmp.ne.s32.totalorder %s267, %s270
    %p279 = scmp.eq.s32.totalorder %s32, 1
    %p280 = por %p278, %p279
    %p281 = scmp.ne.s32.totalorder %s270, %s271
    %p282 = scmp.eq.s32.totalorder %s32, 0
    %p283 = por %p281, %p282
    %p284 = scmp.ne.s32.totalorder %s270, %s271
    %p285 = scmp.eq.s32.totalorder %s33, 1
    %p286 = por %p284, %p285
    %p288 = scmp.ne.s32.totalorder %s271, %s287
    %p289 = scmp.eq.s32.totalorder %s33, 0
    %p290 = por %p288, %p289
    %s291 = ssub.s32 %s27, %s34
    %p292 = scmp.eq.s32.totalorder %s291, 0
    %s294 = sadd.s32 %s293, 1
    %s295 = scalar_select %p292, %s293, %s294
    %p298 = pneg %p292
    %p299 = scmp.eq.s32.totalorder %s27, 1
    %p300 = por %p298, %p299
    %p301 = scmp.ne.s32.totalorder %s293, %s296
    %p302 = scmp.eq.s32.totalorder %s27, 0
    %p303 = por %p301, %p302
    %p304 = scmp.ne.s32.totalorder %s293, %s296
    %p305 = scmp.eq.s32.totalorder %s32, 1
    %p306 = por %p304, %p305
    %p307 = scmp.ne.s32.totalorder %s296, %s297
    %p308 = scmp.eq.s32.totalorder %s32, 0
    %p309 = por %p307, %p308
    %p310 = scmp.ne.s32.totalorder %s296, %s297
    %p311 = scmp.eq.s32.totalorder %s33, 1
    %p312 = por %p310, %p311
    %p314 = scmp.ne.s32.totalorder %s297, %s313
    %p315 = scmp.eq.s32.totalorder %s33, 0
    %p316 = por %p314, %p315
    %s317 = ssub.s32 %s27, %s34
    %p318 = scmp.eq.s32.totalorder %s317, 0
    %s320 = sadd.s32 %s319, 1
    %s321 = scalar_select %p318, %s319, %s320
    %p324 = pneg %p318
    %p325 = scmp.eq.s32.totalorder %s27, 1
    %p326 = por %p324, %p325
    %p327 = scmp.ne.s32.totalorder %s319, %s322
    %p328 = scmp.eq.s32.totalorder %s27, 0
    %p329 = por %p327, %p328
    %p330 = scmp.ne.s32.totalorder %s319, %s322
    %p331 = scmp.eq.s32.totalorder %s32, 1
    %p332 = por %p330, %p331
    %p333 = scmp.ne.s32.totalorder %s322, %s323
    %p334 = scmp.eq.s32.totalorder %s32, 0
    %p335 = por %p333, %p334
    %p336 = scmp.ne.s32.totalorder %s322, %s323
    %p337 = scmp.eq.s32.totalorder %s33, 1
    %p338 = por %p336, %p337
    %p340 = scmp.ne.s32.totalorder %s323, %s339
    %p341 = scmp.eq.s32.totalorder %s33, 0
    %p342 = por %p340, %p341
    %s343 = ssub.s32 %s27, %s34
    %p344 = scmp.eq.s32.totalorder %s343, 0
    %s346 = sadd.s32 %s345, 1
    %s347 = scalar_select %p344, %s345, %s346
    %p350 = pneg %p344
    %p351 = scmp.eq.s32.totalorder %s27, 1
    %p352 = por %p350, %p351
    %p353 = scmp.ne.s32.totalorder %s345, %s348
    %p354 = scmp.eq.s32.totalorder %s27, 0
    %p355 = por %p353, %p354
    %p356 = scmp.ne.s32.totalorder %s345, %s348
    %p357 = scmp.eq.s32.totalorder %s32, 1
    %p358 = por %p356, %p357
    %p359 = scmp.ne.s32.totalorder %s348, %s349
    %p360 = scmp.eq.s32.totalorder %s32, 0
    %p361 = por %p359, %p360
    %p362 = scmp.ne.s32.totalorder %s348, %s349
    %p363 = scmp.eq.s32.totalorder %s33, 1
    %p364 = por %p362, %p363
    %p366 = scmp.ne.s32.totalorder %s349, %s365
    %p367 = scmp.eq.s32.totalorder %s33, 0
    %p368 = por %p366, %p367
    %s369 = ssub.s32 %s27, %s34
    %p370 = scmp.eq.s32.totalorder %s369, 0
    %s372 = sadd.s32 %s371, 1
    %s373 = scalar_select %p370, %s371, %s372
    %p376 = pneg %p370
    %p377 = scmp.eq.s32.totalorder %s27, 1
    %p378 = por %p376, %p377
    %p379 = scmp.ne.s32.totalorder %s371, %s374
    %p380 = scmp.eq.s32.totalorder %s27, 0
    %p381 = por %p379, %p380
    %p382 = scmp.ne.s32.totalorder %s371, %s374
    %p383 = scmp.eq.s32.totalorder %s32, 1
    %p384 = por %p382, %p383
    %p385 = scmp.ne.s32.totalorder %s374, %s375
    %p386 = scmp.eq.s32.totalorder %s32, 0
    %p387 = por %p385, %p386
    %p388 = scmp.ne.s32.totalorder %s374, %s375
    %p389 = scmp.eq.s32.totalorder %s33, 1
    %p390 = por %p388, %p389
    %p392 = scmp.ne.s32.totalorder %s375, %s391
    %p393 = scmp.eq.s32.totalorder %s33, 0
    %p394 = por %p392, %p393
    %s395 = ssub.s32 %s27, %s34
    %p396 = scmp.eq.s32.totalorder %s395, 0
    %s398 = sadd.s32 %s397, 1
    %s399 = scalar_select %p396, %s397, %s398
    %p402 = pneg %p396
    %p403 = scmp.eq.s32.totalorder %s27, 1
    %p404 = por %p402, %p403
    %p405 = scmp.ne.s32.totalorder %s397, %s400
    %p406 = scmp.eq.s32.totalorder %s27, 0
    %p407 = por %p405, %p406
    %p408 = scmp.ne.s32.totalorder %s397, %s400
    %p409 = scmp.eq.s32.totalorder %s32, 1
    %p410 = por %p408, %p409
    %p411 = scmp.ne.s32.totalorder %s400, %s401
    %p412 = scmp.eq.s32.totalorder %s32, 0
    %p413 = por %p411, %p412
    %p414 = scmp.ne.s32.totalorder %s400, %s401
    %p415 = scmp.eq.s32.totalorder %s33, 1
    %p416 = por %p414, %p415
    %p418 = scmp.ne.s32.totalorder %s401, %s417
    %p419 = scmp.eq.s32.totalorder %s33, 0
    %p420 = por %p418, %p419
    %s421 = ssub.s32 %s27, %s34
    %p422 = scmp.eq.s32.totalorder %s421, 0
    %s424 = sadd.s32 %s423, 1
    %s425 = scalar_select %p422, %s423, %s424
    %p428 = pneg %p422
    %p429 = scmp.eq.s32.totalorder %s27, 1
    %p430 = por %p428, %p429
    %p431 = scmp.ne.s32.totalorder %s423, %s426
    %p432 = scmp.eq.s32.totalorder %s27, 0
    %p433 = por %p431, %p432
    %p434 = scmp.ne.s32.totalorder %s423, %s426
    %p435 = scmp.eq.s32.totalorder %s32, 1
    %p436 = por %p434, %p435
    %p437 = scmp.ne.s32.totalorder %s426, %s427
    %p438 = scmp.eq.s32.totalorder %s32, 0
    %p439 = por %p437, %p438
    %p440 = scmp.ne.s32.totalorder %s426, %s427
    %p441 = scmp.eq.s32.totalorder %s33, 1
    %p442 = por %p440, %p441
    %p444 = scmp.ne.s32.totalorder %s427, %s443
    %p445 = scmp.eq.s32.totalorder %s33, 0
    %p446 = por %p444, %p445
    %s447 = ssub.s32 %s27, %s34
    %p448 = scmp.eq.s32.totalorder %s447, 0
    %s450 = sadd.s32 %s449, 1
    %s451 = scalar_select %p448, %s449, %s450
    %p454 = pneg %p448
    %p455 = scmp.eq.s32.totalorder %s27, 1
    %p456 = por %p454, %p455
    %p457 = scmp.ne.s32.totalorder %s449, %s452
    %p458 = scmp.eq.s32.totalorder %s27, 0
    %p459 = por %p457, %p458
    %p460 = scmp.ne.s32.totalorder %s449, %s452
    %p461 = scmp.eq.s32.totalorder %s32, 1
    %p462 = por %p460, %p461
    %p463 = scmp.ne.s32.totalorder %s452, %s453
    %p464 = scmp.eq.s32.totalorder %s32, 0
    %p465 = por %p463, %p464
    %p466 = scmp.ne.s32.totalorder %s452, %s453
    %p467 = scmp.eq.s32.totalorder %s33, 1
    %p468 = por %p466, %p467
    %p470 = scmp.ne.s32.totalorder %s453, %s469
    %p471 = scmp.eq.s32.totalorder %s33, 0
    %p472 = por %p470, %p471
    %s474 = sadd.s32 %s473, 1
    %p477 = scmp.eq.s32.totalorder %s27, 1
    %p478 = scmp.ne.s32.totalorder %s473, %s475
    %p479 = scmp.eq.s32.totalorder %s27, 0
    %p480 = por %p478, %p479
    %p481 = scmp.ne.s32.totalorder %s473, %s475
    %p482 = scmp.eq.s32.totalorder %s32, 1
    %p483 = por %p481, %p482
    %p484 = scmp.ne.s32.totalorder %s475, %s476
    %p485 = scmp.eq.s32.totalorder %s32, 0
    %p486 = por %p484, %p485
    %p487 = scmp.ne.s32.totalorder %s475, %s476
    %p488 = scmp.eq.s32.totalorder %s33, 1
    %p489 = por %p487, %p488
    %p491 = scmp.ne.s32.totalorder %s476, %s490
    %p492 = scmp.eq.s32.totalorder %s33, 0
    %p493 = por %p491, %p492
    %s495 = sadd.s32 %s494, 1
    %p498 = scmp.eq.s32.totalorder %s27, 1
    %p499 = scmp.ne.s32.totalorder %s494, %s496
    %p500 = scmp.eq.s32.totalorder %s27, 0
    %p501 = por %p499, %p500
    %p502 = scmp.ne.s32.totalorder %s494, %s496
    %p503 = scmp.eq.s32.totalorder %s32, 1
    %p504 = por %p502, %p503
    %p505 = scmp.ne.s32.totalorder %s496, %s497
    %p506 = scmp.eq.s32.totalorder %s32, 0
    %p507 = por %p505, %p506
    %p508 = scmp.ne.s32.totalorder %s496, %s497
    %p509 = scmp.eq.s32.totalorder %s33, 1
    %p510 = por %p508, %p509
    %p512 = scmp.ne.s32.totalorder %s497, %s511
    %p513 = scmp.eq.s32.totalorder %s33, 0
    %p514 = por %p512, %p513
    %s516 = sadd.s32 %s515, 1
    %p519 = scmp.eq.s32.totalorder %s27, 1
    %p520 = scmp.ne.s32.totalorder %s515, %s517
    %p521 = scmp.eq.s32.totalorder %s27, 0
    %p522 = por %p520, %p521
    %p523 = scmp.ne.s32.totalorder %s515, %s517
    %p524 = scmp.eq.s32.totalorder %s32, 1
    %p525 = por %p523, %p524
    %p526 = scmp.ne.s32.totalorder %s517, %s518
    %p527 = scmp.eq.s32.totalorder %s32, 0
    %p528 = por %p526, %p527
    %p529 = scmp.ne.s32.totalorder %s517, %s518
    %p530 = scmp.eq.s32.totalorder %s33, 1
    %p531 = por %p529, %p530
    %p533 = scmp.ne.s32.totalorder %s518, %s532
    %p534 = scmp.eq.s32.totalorder %s33, 0
    %p535 = por %p533, %p534
    %s537 = sadd.s32 %s536, 1
    %p540 = scmp.eq.s32.totalorder %s27, 1
    %p541 = scmp.ne.s32.totalorder %s536, %s538
    %p542 = scmp.eq.s32.totalorder %s27, 0
    %p543 = por %p541, %p542
    %p544 = scmp.ne.s32.totalorder %s536, %s538
    %p545 = scmp.eq.s32.totalorder %s32, 1
    %p546 = por %p544, %p545
    %p547 = scmp.ne.s32.totalorder %s538, %s539
    %p548 = scmp.eq.s32.totalorder %s32, 0
    %p549 = por %p547, %p548
    %p550 = scmp.ne.s32.totalorder %s538, %s539
    %p551 = scmp.eq.s32.totalorder %s33, 1
    %p552 = por %p550, %p551
    %p554 = scmp.ne.s32.totalorder %s539, %s553
    %p555 = scmp.eq.s32.totalorder %s33, 0
    %p556 = por %p554, %p555
    %p557 = scmp.le.s32.totalorder 1, %s27
    %p558 = scmp.lt.s32.totalorder %s27, 3
    %p559 = pnand %p557, %p558
    %p560 = pneg %p559
    // Predicated region
    $region9: #{clip_model_inc_forward.1} parent=5 // pred_check
      _
    $region10: #{clip_model_inc_forward.1} parent=5 // pred_check_branch
      %562 = sbr.rel (%p559) target = $region12
    $region11: #{clip_model_inc_forward.1} parent=5 // pred_region
      %s563 = ssub.s32 %s27, 1
      // Predicated region
      $region13: #{clip_model_inc_forward.1} parent=11 // pred_check
        %p564 = pneg %p48
      $region14: #{clip_model_inc_forward.1} parent=11 // pred_check_branch
        %566 = sbr.rel (%p564) target = $region16
      $region15: #{clip_model_inc_forward.1} parent=11 // pred_region
        _
      $region16: #{clip_model_inc_forward.1} parent=11 // pred_fallthru
        _
      // Predicated region
      $region17: #{clip_model_inc_forward.1} parent=11 // pred_check
        %p567 = pneg %p69
      $region18: #{clip_model_inc_forward.1} parent=11 // pred_check_branch
        %569 = sbr.rel (%p567) target = $region20
      $region19: #{clip_model_inc_forward.1} parent=11 // pred_region
        _
      $region20: #{clip_model_inc_forward.1} parent=11 // pred_fallthru
        _
      // Predicated region
      $region21: #{clip_model_inc_forward.1} parent=11 // pred_check
        %p570 = pneg %p90
      $region22: #{clip_model_inc_forward.1} parent=11 // pred_check_branch
        %572 = sbr.rel (%p570) target = $region24
      $region23: #{clip_model_inc_forward.1} parent=11 // pred_region
        _
      $region24: #{clip_model_inc_forward.1} parent=11 // pred_fallthru
        _
      // Predicated region
      $region25: #{clip_model_inc_forward.1} parent=11 // pred_check
        %p573 = pneg %p111
      $region26: #{clip_model_inc_forward.1} parent=11 // pred_check_branch
        %575 = sbr.rel (%p573) target = $region28
      $region27: #{clip_model_inc_forward.1} parent=11 // pred_region
        _
      $region28: #{clip_model_inc_forward.1} parent=11 // pred_fallthru
        _
      // Predicated region
      $region29: #{clip_model_inc_forward.1} parent=11 // pred_check
        %p576 = pneg %p132
      $region30: #{clip_model_inc_forward.1} parent=11 // pred_check_branch
        %578 = sbr.rel (%p576) target = $region32
      $region31: #{clip_model_inc_forward.1} parent=11 // pred_region
        _
      $region32: #{clip_model_inc_forward.1} parent=11 // pred_fallthru
        _
      // Predicated region
      $region33: #{clip_model_inc_forward.1} parent=11 // pred_check
        %p579 = pneg %p153
      $region34: #{clip_model_inc_forward.1} parent=11 // pred_check_branch
        %581 = sbr.rel (%p579) target = $region36
      $region35: #{clip_model_inc_forward.1} parent=11 // pred_region
        _
      $region36: #{clip_model_inc_forward.1} parent=11 // pred_fallthru
        _
      // Predicated region
      $region37: #{clip_model_inc_forward.1} parent=11 // pred_check
        %p582 = pneg %p486
      $region38: #{clip_model_inc_forward.1} parent=11 // pred_check_branch
        %584 = sbr.rel (%p582) target = $region40
      $region39: #{clip_model_inc_forward.1} parent=11 // pred_region
        _
      $region40: #{clip_model_inc_forward.1} parent=11 // pred_fallthru
        _
      // Predicated region
      $region41: #{clip_model_inc_forward.1} parent=11 // pred_check
        %p585 = pneg %p507
      $region42: #{clip_model_inc_forward.1} parent=11 // pred_check_branch
        %587 = sbr.rel (%p585) target = $region44
      $region43: #{clip_model_inc_forward.1} parent=11 // pred_region
        _
      $region44: #{clip_model_inc_forward.1} parent=11 // pred_fallthru
        _
      // Predicated region
      $region45: #{clip_model_inc_forward.1} parent=11 // pred_check
        %p588 = pneg %p528
      $region46: #{clip_model_inc_forward.1} parent=11 // pred_check_branch
        %590 = sbr.rel (%p588) target = $region48
      $region47: #{clip_model_inc_forward.1} parent=11 // pred_region
        _
      $region48: #{clip_model_inc_forward.1} parent=11 // pred_fallthru
        _
    $region12: #{clip_model_inc_forward.1} parent=5 // pred_fallthru
      _
    %p591 = scmp.lt.s32.totalorder %s27, 2
    // Predicated region
    $region49: #{clip_model_inc_forward.1} parent=5 // pred_check
      %p592 = pneg %p591
    $region50: #{clip_model_inc_forward.1} parent=5 // pred_check_branch
      %594 = sbr.rel (%p592) target = $region52
    $region51: #{clip_model_inc_forward.1} parent=5 // pred_region
      // Predicated region
      $region53: #{clip_model_inc_forward.1} parent=51 // pred_check
        %p595 = pneg %p173
      $region54: #{clip_model_inc_forward.1} parent=51 // pred_check_branch
        %597 = sbr.rel (%p595) target = $region56
      $region55: #{clip_model_inc_forward.1} parent=51 // pred_region
        %p598 = scmp.lt.s32.totalorder %s27, 1
        %s599 = scalar_select %p598, %s27, 1
        %s600 = scalar_lea.vmem %s6, %s599
      $region56: #{clip_model_inc_forward.1} parent=51 // pred_fallthru
        _
      // Predicated region
      $region57: #{clip_model_inc_forward.1} parent=51 // pred_check
        %p601 = pneg %p199
      $region58: #{clip_model_inc_forward.1} parent=51 // pred_check_branch
        %603 = sbr.rel (%p601) target = $region60
      $region59: #{clip_model_inc_forward.1} parent=51 // pred_region
        %p604 = scmp.lt.s32.totalorder %s27, 1
        %s605 = scalar_select %p604, %s27, 1
        %s606 = scalar_lea.vmem %s7, %s605
      $region60: #{clip_model_inc_forward.1} parent=51 // pred_fallthru
        _
      // Predicated region
      $region61: #{clip_model_inc_forward.1} parent=51 // pred_check
        %p607 = pneg %p225
      $region62: #{clip_model_inc_forward.1} parent=51 // pred_check_branch
        %609 = sbr.rel (%p607) target = $region64
      $region63: #{clip_model_inc_forward.1} parent=51 // pred_region
        %p610 = scmp.lt.s32.totalorder %s27, 1
        %s611 = scalar_select %p610, %s27, 1
        %s612 = smul.addr %s611, 4
        %s613 = smul.addr %s612, 4
        %s614 = scalar_lea.vmem %s8, %s613
      $region64: #{clip_model_inc_forward.1} parent=51 // pred_fallthru
        _
      // Predicated region
      $region65: #{clip_model_inc_forward.1} parent=51 // pred_check
        %p615 = pneg %p251
      $region66: #{clip_model_inc_forward.1} parent=51 // pred_check_branch
        %617 = sbr.rel (%p615) target = $region68
      $region67: #{clip_model_inc_forward.1} parent=51 // pred_region
        %p618 = scmp.lt.s32.totalorder %s27, 1
        %s619 = scalar_select %p618, %s27, 1
        %s620 = scalar_lea.vmem %s9, %s619
      $region68: #{clip_model_inc_forward.1} parent=51 // pred_fallthru
        _
      // Predicated region
      $region69: #{clip_model_inc_forward.1} parent=51 // pred_check
        %p621 = pneg %p277
      $region70: #{clip_model_inc_forward.1} parent=51 // pred_check_branch
        %623 = sbr.rel (%p621) target = $region72
      $region71: #{clip_model_inc_forward.1} parent=51 // pred_region
        %p624 = scmp.lt.s32.totalorder %s27, 1
        %s625 = scalar_select %p624, %s27, 1
        %s626 = smul.addr %s625, 4
        %s627 = smul.addr %s626, 4
        %s628 = scalar_lea.vmem %s10, %s627
      $region72: #{clip_model_inc_forward.1} parent=51 // pred_fallthru
        _
      // Predicated region
      $region73: #{clip_model_inc_forward.1} parent=51 // pred_check
        %p629 = pneg %p303
      $region74: #{clip_model_inc_forward.1} parent=51 // pred_check_branch
        %631 = sbr.rel (%p629) target = $region76
      $region75: #{clip_model_inc_forward.1} parent=51 // pred_region
        %p632 = scmp.lt.s32.totalorder %s27, 1
        %s633 = scalar_select %p632, %s27, 1
        %s634 = scalar_lea.vmem %s11, %s633
      $region76: #{clip_model_inc_forward.1} parent=51 // pred_fallthru
        _
      // Predicated region
      $region77: #{clip_model_inc_forward.1} parent=51 // pred_check
        %p635 = pneg %p329
      $region78: #{clip_model_inc_forward.1} parent=51 // pred_check_branch
        %637 = sbr.rel (%p635) target = $region80
      $region79: #{clip_model_inc_forward.1} parent=51 // pred_region
        %p638 = scmp.lt.s32.totalorder %s27, 1
        %s639 = scalar_select %p638, %s27, 1
        %s640 = scalar_lea.vmem %s12, %s639
      $region80: #{clip_model_inc_forward.1} parent=51 // pred_fallthru
        _
      // Predicated region
      $region81: #{clip_model_inc_forward.1} parent=51 // pred_check
        %p641 = pneg %p355
      $region82: #{clip_model_inc_forward.1} parent=51 // pred_check_branch
        %643 = sbr.rel (%p641) target = $region84
      $region83: #{clip_model_inc_forward.1} parent=51 // pred_region
        %p644 = scmp.lt.s32.totalorder %s27, 1
        %s645 = scalar_select %p644, %s27, 1
        %s646 = scalar_lea.vmem %s13, %s645
      $region84: #{clip_model_inc_forward.1} parent=51 // pred_fallthru
        _
      // Predicated region
      $region85: #{clip_model_inc_forward.1} parent=51 // pred_check
        %p647 = pneg %p381
      $region86: #{clip_model_inc_forward.1} parent=51 // pred_check_branch
        %649 = sbr.rel (%p647) target = $region88
      $region87: #{clip_model_inc_forward.1} parent=51 // pred_region
        %p650 = scmp.lt.s32.totalorder %s27, 1
        %s651 = scalar_select %p650, %s27, 1
        %s652 = smul.addr %s651, 4
        %s653 = smul.addr %s652, 4
        %s654 = scalar_lea.vmem %s14, %s653
      $region88: #{clip_model_inc_forward.1} parent=51 // pred_fallthru
        _
      // Predicated region
      $region89: #{clip_model_inc_forward.1} parent=51 // pred_check
        %p655 = pneg %p407
      $region90: #{clip_model_inc_forward.1} parent=51 // pred_check_branch
        %657 = sbr.rel (%p655) target = $region92
      $region91: #{clip_model_inc_forward.1} parent=51 // pred_region
        %p658 = scmp.lt.s32.totalorder %s27, 1
        %s659 = scalar_select %p658, %s27, 1
        %s660 = scalar_lea.vmem %s15, %s659
      $region92: #{clip_model_inc_forward.1} parent=51 // pred_fallthru
        _
      // Predicated region
      $region93: #{clip_model_inc_forward.1} parent=51 // pred_check
        %p661 = pneg %p433
      $region94: #{clip_model_inc_forward.1} parent=51 // pred_check_branch
        %663 = sbr.rel (%p661) target = $region96
      $region95: #{clip_model_inc_forward.1} parent=51 // pred_region
        %p664 = scmp.lt.s32.totalorder %s27, 1
        %s665 = scalar_select %p664, %s27, 1
        %s666 = smul.addr %s665, 16
        %s667 = smul.addr %s666, 4
        %s668 = scalar_lea.vmem %s16, %s667
      $region96: #{clip_model_inc_forward.1} parent=51 // pred_fallthru
        _
      // Predicated region
      $region97: #{clip_model_inc_forward.1} parent=51 // pred_check
        %p669 = pneg %p459
      $region98: #{clip_model_inc_forward.1} parent=51 // pred_check_branch
        %671 = sbr.rel (%p669) target = $region100
      $region99: #{clip_model_inc_forward.1} parent=51 // pred_region
        %p672 = scmp.lt.s32.totalorder %s27, 1
        %s673 = scalar_select %p672, %s27, 1
        %s674 = scalar_lea.vmem %s17, %s673
      $region100: #{clip_model_inc_forward.1} parent=51 // pred_fallthru
        _
    $region52: #{clip_model_inc_forward.1} parent=5 // pred_fallthru
      _
    %p675 = scmp.le.s32.totalorder 1, %s27
    %p676 = scmp.lt.s32.totalorder %s27, 3
    %p677 = pnand %p675, %p676
    %p678 = pneg %p677
    // Predicated region
    $region101: #{clip_model_inc_forward.1} parent=5 // pred_check
      _
    $region102: #{clip_model_inc_forward.1} parent=5 // pred_check_branch
      %680 = sbr.rel (%p677) target = $region104
    $region103: #{clip_model_inc_forward.1} parent=5 // pred_region
      %s681 = ssub.s32 %s27, 1
      %p682 = pneg %p48
      %p683 = pneg %p45
      %p684 = pneg %p69
      %p685 = pneg %p66
      %p686 = pneg %p90
      %p687 = pneg %p87
      %p688 = pneg %p111
      %p689 = pneg %p108
      %p690 = pneg %p132
      %p691 = pneg %p129
      %p692 = pneg %p153
      %p693 = pneg %p150
      %p694 = scmp.lt.s32.totalorder %s32, 1
      %s695 = scalar_select %p694, %s32, 1
      %s696 = scalar_lea.vmem %s6, %s695
      %p697 = pneg %p179
      %p698 = pneg %p176
      %p699 = scmp.lt.s32.totalorder %s32, 1
      %s700 = scalar_select %p699, %s32, 1
      %s701 = scalar_lea.vmem %s7, %s700
      %p702 = pneg %p205
      %p703 = pneg %p202
      %p704 = scmp.lt.s32.totalorder %s32, 1
      %s705 = scalar_select %p704, %s32, 1
      %s706 = smul.addr %s705, 4
      %s707 = smul.addr %s706, 4
      %s708 = scalar_lea.vmem %s8, %s707
      %p709 = pneg %p231
      %p710 = pneg %p228
      %p711 = scmp.lt.s32.totalorder %s32, 1
      %s712 = scalar_select %p711, %s32, 1
      %s713 = scalar_lea.vmem %s9, %s712
      %p714 = pneg %p257
      %p715 = pneg %p254
      %p716 = scmp.lt.s32.totalorder %s32, 1
      %s717 = scalar_select %p716, %s32, 1
      %s718 = smul.addr %s717, 4
      %s719 = smul.addr %s718, 4
      %s720 = scalar_lea.vmem %s10, %s719
      %p721 = pneg %p283
      %p722 = pneg %p280
      %p723 = scmp.lt.s32.totalorder %s32, 1
      %s724 = scalar_select %p723, %s32, 1
      %s725 = scalar_lea.vmem %s11, %s724
      %p726 = pneg %p309
      %p727 = pneg %p306
      %p728 = scmp.lt.s32.totalorder %s32, 1
      %s729 = scalar_select %p728, %s32, 1
      %s730 = scalar_lea.vmem %s12, %s729
      %p731 = pneg %p335
      %p732 = pneg %p332
      %p733 = scmp.lt.s32.totalorder %s32, 1
      %s734 = scalar_select %p733, %s32, 1
      %s735 = scalar_lea.vmem %s13, %s734
      %p736 = pneg %p361
      %p737 = pneg %p358
      %p738 = scmp.lt.s32.totalorder %s32, 1
      %s739 = scalar_select %p738, %s32, 1
      %s740 = smul.addr %s739, 4
      %s741 = smul.addr %s740, 4
      %s742 = scalar_lea.vmem %s14, %s741
      %p743 = pneg %p387
      %p744 = pneg %p384
      %p745 = scmp.lt.s32.totalorder %s32, 1
      %s746 = scalar_select %p745, %s32, 1
      %s747 = scalar_lea.vmem %s15, %s746
      %p748 = pneg %p413
      %p749 = pneg %p410
      %p750 = scmp.lt.s32.totalorder %s32, 1
      %s751 = scalar_select %p750, %s32, 1
      %s752 = smul.addr %s751, 16
      %s753 = smul.addr %s752, 4
      %s754 = scalar_lea.vmem %s16, %s753
      %p755 = pneg %p439
      %p756 = pneg %p436
      %p757 = scmp.lt.s32.totalorder %s32, 1
      %s758 = scalar_select %p757, %s32, 1
      %s759 = scalar_lea.vmem %s17, %s758
      %p760 = pneg %p465
      %p761 = pneg %p462
      %p762 = pneg %p486
      %p763 = pneg %p483
      %p764 = pneg %p507
      %p765 = pneg %p504
      %p766 = pneg %p528
      %p767 = pneg %p525
      %p768 = pneg %p549
      %p769 = pneg %p546
      %p770 = scmp.lt.s32.totalorder %s32, 1
      %s771 = scalar_select %p770, %s32, 1
      %s772 = scalar_lea.vmem %s6, %s771
      %p773 = scmp.lt.s32.totalorder %s32, 1
      %s774 = scalar_select %p773, %s32, 1
      %s775 = scalar_lea.vmem %s7, %s774
      %p776 = scmp.lt.s32.totalorder %s32, 1
      %s777 = scalar_select %p776, %s32, 1
      %s778 = smul.addr %s777, 4
      %s779 = smul.addr %s778, 4
      %s780 = scalar_lea.vmem %s8, %s779
      %p781 = scmp.lt.s32.totalorder %s32, 1
      %s782 = scalar_select %p781, %s32, 1
      %s783 = scalar_lea.vmem %s9, %s782
      %p784 = scmp.lt.s32.totalorder %s32, 1
      %s785 = scalar_select %p784, %s32, 1
      %s786 = smul.addr %s785, 4
      %s787 = smul.addr %s786, 4
      %s788 = scalar_lea.vmem %s10, %s787
      %p789 = scmp.lt.s32.totalorder %s32, 1
      %s790 = scalar_select %p789, %s32, 1
      %s791 = scalar_lea.vmem %s11, %s790
      %p792 = scmp.lt.s32.totalorder %s32, 1
      %s793 = scalar_select %p792, %s32, 1
      %s794 = scalar_lea.vmem %s12, %s793
      %p795 = scmp.lt.s32.totalorder %s32, 1
      %s796 = scalar_select %p795, %s32, 1
      %s797 = scalar_lea.vmem %s13, %s796
      %p798 = scmp.lt.s32.totalorder %s32, 1
      %s799 = scalar_select %p798, %s32, 1
      %s800 = smul.addr %s799, 4
      %s801 = smul.addr %s800, 4
      %s802 = scalar_lea.vmem %s14, %s801
      %p803 = scmp.lt.s32.totalorder %s32, 1
      %s804 = scalar_select %p803, %s32, 1
      %s805 = scalar_lea.vmem %s15, %s804
      %p806 = scmp.lt.s32.totalorder %s32, 1
      %s807 = scalar_select %p806, %s32, 1
      %s808 = smul.addr %s807, 16
      %s809 = smul.addr %s808, 4
      %s810 = scalar_lea.vmem %s16, %s809
      %p811 = scmp.lt.s32.totalorder %s32, 1
      %s812 = scalar_select %p811, %s32, 1
      %s813 = scalar_lea.vmem %s17, %s812
      %p815 = scmp.eq.s32.totalorder %s32, 0
      // Predicated region
      $region105: #{clip_model_inc_forward.1} parent=103 // pred_check
        %p816 = pneg %p815
      $region106: #{clip_model_inc_forward.1} parent=103 // pred_check_branch
        %818 = sbr.rel (%p816) target = $region108
      $region107: #{clip_model_inc_forward.1} parent=103 // pred_region
        %v819 = vld [vmem:[%s0] sm:$0xff]
        %v820 = vld [vmem:[%s0 + $0x8] sm:$0xff]
        %v821 = vld [vmem:[%s1] sm:$0xf]
        %v822 = vld [vmem:[%s1 + $0x4] sm:$0xf]
        %v823 = vld [vmem:[%s1 + $0x8] sm:$0xf]
        %v824 = vld [vmem:[%s1 + $0xc] sm:$0xf]
        %v825 = vld [vmem:[%s1 + $0x10] sm:$0xf]
        %v826 = vld [vmem:[%s1 + $0x14] sm:$0xf]
        %v827 = vld [vmem:[%s1 + $0x18] sm:$0xf]
        %v828 = vld [vmem:[%s1 + $0x1c] sm:$0xf]
        %v829 = vld [vmem:[%s1 + $0x20] sm:$0xf]
        %v830 = vld [vmem:[%s1 + $0x24] sm:$0xf]
        %v831 = vld [vmem:[%s1 + $0x28] sm:$0xf]
        %v832 = vld [vmem:[%s1 + $0x2c] sm:$0xf]
        %v833 = vld [vmem:[%s1 + $0x30] sm:$0xf]
        %v834 = vld [vmem:[%s1 + $0x34] sm:$0xf]
        %v835 = vld [vmem:[%s1 + $0x38] sm:$0xf]
        %v836 = vld [vmem:[%s1 + $0x3c] sm:$0xf]
        %v837 = vld [vmem:[%s1 + $0x40] sm:$0xf]
        %v838 = vld [vmem:[%s1 + $0x44] sm:$0xf]
        %v839 = vld [vmem:[%s1 + $0x48] sm:$0xf]
        %v840 = vld [vmem:[%s1 + $0x4c] sm:$0xf]
        %v841 = vld [vmem:[%s1 + $0x50] sm:$0xf]
        %v842 = vld [vmem:[%s1 + $0x54] sm:$0xf]
        %v843 = vld [vmem:[%s1 + $0x58] sm:$0xf]
        %v844 = vld [vmem:[%s1 + $0x5c] sm:$0xf]
        %v845 = vpack.c.bf16 %v819, %v819
        %v846 = vpack.c.bf16 %v820, %v820
        %v871 = vunpack.c.l.b16 %v821
        %v872 = vunpack.c.l.b16 %v822
        %v873 = vunpack.c.l.b16 %v823
        %v874 = vunpack.c.l.b16 %v824
        %v875 = vunpack.c.l.b16 %v825
        %v876 = vunpack.c.l.b16 %v826
        %v877 = vunpack.c.l.b16 %v827
        %v878 = vunpack.c.l.b16 %v828
        %v879 = vunpack.c.l.b16 %v829
        %v880 = vunpack.c.l.b16 %v830
        %v881 = vunpack.c.l.b16 %v831
        %v882 = vunpack.c.l.b16 %v832
        %v883 = vunpack.c.l.b16 %v833
        %v884 = vunpack.c.l.b16 %v834
        %v885 = vunpack.c.l.b16 %v835
        %v886 = vunpack.c.l.b16 %v836
        %v887 = vunpack.c.l.b16 %v837
        %v888 = vunpack.c.l.b16 %v838
        %v889 = vunpack.c.l.b16 %v839
        %v890 = vunpack.c.l.b16 %v840
        %v891 = vunpack.c.l.b16 %v841
        %v892 = vunpack.c.l.b16 %v842
        %v893 = vunpack.c.l.b16 %v843
        %v894 = vunpack.c.l.b16 %v844
        %v895 = vpack.c.b16 %v872, %v871
        %v896 = vpack.c.b16 %v874, %v873
        %v897 = vpack.c.b16 %v876, %v875
        %v898 = vpack.c.b16 %v878, %v877
        %v899 = vpack.c.b16 %v880, %v879
        %v900 = vpack.c.b16 %v882, %v881
        %v901 = vpack.c.b16 %v884, %v883
        %v902 = vpack.c.b16 %v886, %v885
        %v903 = vpack.c.b16 %v888, %v887
        %v904 = vpack.c.b16 %v890, %v889
        %v905 = vpack.c.b16 %v892, %v891
        %v906 = vpack.c.b16 %v894, %v893
        %vm919 = vcmask 523264
        %v921 = vsel %vm919, %v846, 0
        %923 = vmatprep.subr.bf16.mxu0 0
        %924 = vmatpush1.bf16.msra.mxu0 %v902
        %925 = vmatprep.subr.bf16.mxu0 0
        %926 = vmatpush1.bf16.msra.mxu0 %v901
        %927 = vmatprep.subr.bf16.mxu0 0
        %928 = vmatpush1.bf16.msra.mxu0 %v900
        %929 = vmatprep.subr.bf16.mxu0 0
        %930 = vmatpush1.bf16.msra.mxu0 %v899
        %931 = vmatprep.subr.bf16.mxu0 0
        %932 = vmatpush1.bf16.msra.mxu0 %v898
        %933 = vmatprep.subr.bf16.mxu0 0
        %934 = vmatpush1.bf16.msra.mxu0 %v897
        %935 = vmatprep.subr.bf16.mxu0 0
        %936 = vmatpush1.bf16.msra.mxu0 %v896
        %937 = vmatprep.subr.bf16.mxu0 0
        %938 = vmatpush1.bf16.msra.mxu0 %v895
        %939 = vmatprep.subr.bf16.mxu0 0
        %940 = vmatpush2.bf16.msra.mxu0 0
        %941 = vmatprep.subr.bf16.mxu0 0
        %942 = vmatpush2.bf16.msra.mxu0 0
        %943 = vmatprep.subr.bf16.mxu0 0
        %944 = vmatpush2.bf16.msra.mxu0 0
        %945 = vmatprep.subr.bf16.mxu0 0
        %946 = vmatpush2.bf16.msra.mxu0 0
        %947 = vmatprep.subr.bf16.mxu0 0
        %948 = vmatpush2.bf16.msra.mxu0 %v906
        %949 = vmatprep.subr.bf16.mxu0 0
        %950 = vmatpush2.bf16.msra.mxu0 %v905
        %951 = vmatprep.subr.bf16.mxu0 0
        %952 = vmatpush2.bf16.msra.mxu0 %v904
        %953 = vmatprep.subr.bf16.mxu0 0
        %954 = vmatpush2.bf16.msra.mxu0 %v903
        %955 = vmatprep.mubr.bf16.mxu0 %v921
        %956 = vmatmul.mubr.bf16.gmra.mxu0 %v845
        %v957 = vpop.f32.mrf.mxu0
        %v958 = vadd.f32 0.0, %v957
        %v959 = vpop.f32.mrf.mxu0
        %v960 = vpop.f32.mrf.mxu0
        %v961 = vpop.f32.mrf.mxu0
        %962 = vdwg.mxu0
        %v963 = vld [vmem:[%s2] sm:$0x1]
        %v964 = vld [vmem:[%s3] sm:$0x1]
        %v965 = vadd.f32 %v963, %v964
        %v966 = vld [vmem:[%s3 + $0x1] sm:$0xf]
        %v967 = vadd.f32 %v958, %v966
        %v969 = vrot.slane %v966, 4
        %v971 = vadd.f32 %v958, %v969
        %v973 = vrot.slane %v967, 7
        %v976 = vrot.slane %v971, 3
        %vm978 = vcmask 1040384
        %v979 = vsel %vm978, %v965, %v973
        %vm980 = vcmask 1044480
        %v981 = vsel %vm980, %v979, 0.0
        %v982 = vsel %vm978, %v965, %v976
        %v983 = vsel %vm980, %v982, 0.0
        %v984 = vld [vmem:[%s4] sm:$0x1]
        %v985 = vld [vmem:[%s5] sm:$0x1]
        %vm986 = vcmask 261120
        %v987 = vsel %vm986, %v981, 0.0
        %988 = vadd.xlane.f32.xlu0 %v987
        %v989 = vpop.xlane.xlu0 %988
        %v990 = vsel %vm986, %v983, 0.0
        %991 = vadd.xlane.f32.xlu0 %v990
        %v992 = vpop.xlane.xlu0 %991
        %v993 = vrcp.pop 32.0
        %v994 = vmul.f32 %v989, %v993
        %v995 = vmul.f32 %v992, %v993
        %v996 = vsub.f32 %v981, %v994
        %v997 = vsub.f32 %v983, %v995
        %v998 = vmul.f32 %v996, %v996
        %v999 = vmul.f32 %v997, %v997
        %v1000 = vsel %vm986, %v998, 0.0
        %1001 = vadd.xlane.f32.xlu0 %v1000
        %v1002 = vpop.xlane.xlu0 %1001
        %v1003 = vsel %vm986, %v999, 0.0
        %1004 = vadd.xlane.f32.xlu0 %v1003
        %v1005 = vpop.xlane.xlu0 %1004
        %v1006 = vmul.f32 %v1002, %v993
        %v1007 = vmul.f32 %v1005, %v993
        %v1008 = vadd.f32 %v1006, 1e-05
        %v1009 = vadd.f32 %v1007, 1e-05
        %v1010 = vrsqrt.pop %v1008
        %v1011 = vrsqrt.pop %v1009
        %v1012 = vmul.f32 %v996, %v1010
        %v1013 = vmul.f32 %v997, %v1011
        %v1015 = vlaneseq
        %v1016 = vshrl.u32 %v1015, 7
        %v1017 = vsub.s32 0, %v1016
        %v1018 = vrot.slane %v984, %v1017
        %v1020 = vmul.f32 %v1012, %v1018
        %v1021 = vmul.f32 %v1013, %v1018
        %v1023 = vlaneseq
        %v1024 = vshrl.u32 %v1023, 7
        %v1025 = vsub.s32 0, %v1024
        %v1026 = vrot.slane %v985, %v1025
        %v1028 = vadd.f32 %v1020, %v1026
        %v1029 = vadd.f32 %v1021, %v1026
        %1030 = vst.msk [vmem:[#allocation2] sm:$0xff] %vm986, %v1028
        %1031 = vst.msk [vmem:[#allocation2 + $0x8] sm:$0xff] %vm986, %v1029
      $region108: #{clip_model_inc_forward.1} parent=103 // pred_fallthru
        _
      %v1032 = vld [vmem:[#allocation2] sm:$0xff]
      %v1033 = vld [vmem:[#allocation2 + $0x8] sm:$0xff]
      %v1034 = vld [vmem:[%s772] sm:$0x1]
      %v1035 = vld [vmem:[%s775] sm:$0x1]
      %vm1036 = vcmask 261120
      %v1037 = vsel %vm1036, %v1032, 0.0
      %1038 = vadd.xlane.f32.xlu0 %v1037
      %v1039 = vpop.xlane.xlu0 %1038
      %v1040 = vsel %vm1036, %v1033, 0.0
      %1041 = vadd.xlane.f32.xlu0 %v1040
      %v1042 = vpop.xlane.xlu0 %1041
      %v1043 = vrcp.pop 32.0
      %v1044 = vmul.f32 %v1039, %v1043
      %v1045 = vmul.f32 %v1042, %v1043
      %v1046 = vsub.f32 %v1032, %v1044
      %v1047 = vsub.f32 %v1033, %v1045
      %v1048 = vmul.f32 %v1046, %v1046
      %v1049 = vmul.f32 %v1047, %v1047
      %v1050 = vsel %vm1036, %v1048, 0.0
      %1051 = vadd.xlane.f32.xlu0 %v1050
      %v1052 = vpop.xlane.xlu0 %1051
      %v1053 = vsel %vm1036, %v1049, 0.0
      %1054 = vadd.xlane.f32.xlu0 %v1053
      %v1055 = vpop.xlane.xlu0 %1054
      %v1056 = vmul.f32 %v1052, %v1043
      %v1057 = vmul.f32 %v1055, %v1043
      %v1058 = vadd.f32 %v1056, 1e-05
      %v1059 = vadd.f32 %v1057, 1e-05
      %v1060 = vrsqrt.pop %v1058
      %v1061 = vrsqrt.pop %v1059
      %v1062 = vmul.f32 %v1046, %v1060
      %v1063 = vmul.f32 %v1047, %v1061
      %v1065 = vlaneseq
      %v1066 = vshrl.u32 %v1065, 7
      %v1067 = vsub.s32 0, %v1066
      %v1068 = vrot.slane %v1034, %v1067
      %v1070 = vmul.f32 %v1062, %v1068
      %v1071 = vmul.f32 %v1063, %v1068
      %v1073 = vlaneseq
      %v1074 = vshrl.u32 %v1073, 7
      %v1075 = vsub.s32 0, %v1074
      %v1076 = vrot.slane %v1035, %v1075
      %v1078 = vadd.f32 %v1070, %v1076
      %v1079 = vadd.f32 %v1071, %v1076
      %v1080 = vld [vmem:[%s780] sm:$0xf]
      %v1081 = vld [vmem:[%s780 + $0x4] sm:$0xf]
      %v1082 = vld [vmem:[%s780 + $0x8] sm:$0xf]
      %v1083 = vld [vmem:[%s780 + $0xc] sm:$0xf]
      %v1084 = vpack.c.bf16 %v1079, %v1078
      %v1085 = vld [vmem:[%s783] sm:$0x1]
      %v1087 = vlaneseq
      %v1088 = vshrl.u32 %v1087, 7
      %v1089 = vsub.s32 0, %v1088
      %v1090 = vrot.slane %v1085, %v1089
      %v1096 = vunpack.c.l.b16 %v1080
      %v1097 = vunpack.c.l.b16 %v1081
      %v1098 = vunpack.c.l.b16 %v1082
      %v1099 = vunpack.c.l.b16 %v1083
      %v1100 = vpack.c.b16 %v1097, %v1096
      %v1101 = vpack.c.b16 %v1099, %v1098
      %v1105 = vsel %vm1036, %v1084, 0
      %1107 = vmatprep.subr.bf16.mxu0 0
      %1108 = vmatpush1.bf16.msra.mxu0 0
      %1109 = vmatprep.subr.bf16.mxu0 0
      %1110 = vmatpush1.bf16.msra.mxu0 0
      %1111 = vmatprep.subr.bf16.mxu0 0
      %1112 = vmatpush1.bf16.msra.mxu0 0
      %1113 = vmatprep.subr.bf16.mxu0 0
      %1114 = vmatpush1.bf16.msra.mxu0 0
      %1115 = vmatprep.subr.bf16.mxu0 0
      %1116 = vmatpush1.bf16.msra.mxu0 0
      %1117 = vmatprep.subr.bf16.mxu0 0
      %1118 = vmatpush1.bf16.msra.mxu0 0
      %1119 = vmatprep.subr.bf16.mxu0 0
      %1120 = vmatpush1.bf16.msra.mxu0 %v1101
      %1121 = vmatprep.subr.bf16.mxu0 0
      %1122 = vmatpush1.bf16.msra.mxu0 %v1100
      %1123 = vmatprep.subr.bf16.mxu0 0
      %1124 = vmatpush2.bf16.msra.mxu0 0
      %1125 = vmatprep.subr.bf16.mxu0 0
      %1126 = vmatpush2.bf16.msra.mxu0 0
      %1127 = vmatprep.subr.bf16.mxu0 0
      %1128 = vmatpush2.bf16.msra.mxu0 0
      %1129 = vmatprep.subr.bf16.mxu0 0
      %1130 = vmatpush2.bf16.msra.mxu0 0
      %1131 = vmatprep.subr.bf16.mxu0 0
      %1132 = vmatpush2.bf16.msra.mxu0 0
      %1133 = vmatprep.subr.bf16.mxu0 0
      %1134 = vmatpush2.bf16.msra.mxu0 0
      %1135 = vmatprep.subr.bf16.mxu0 0
      %1136 = vmatpush2.bf16.msra.mxu0 0
      %1137 = vmatprep.subr.bf16.mxu0 0
      %1138 = vmatpush2.bf16.msra.mxu0 0
      %1139 = vmatprep.mubr.bf16.mxu0 0
      %1140 = vmatmul.mubr.bf16.gmra.mxu0 %v1105
      %v1141 = vpop.f32.mrf.mxu0
      %v1142 = vadd.f32 %v1090, %v1141
      %v1143 = vpop.f32.mrf.mxu0
      %v1144 = vpop.f32.mrf.mxu0
      %v1145 = vadd.f32 %v1090, %v1144
      %v1146 = vpop.f32.mrf.mxu0
      %1147 = vdwg.mxu0
      %1150 = vrot.lane.b32.xlu0 %v1142, 120
      %v1151 = vpop.permute.xlu0 %1150
      %1152 = vrot.lane.b32.xlu0 %v1145, 120
      %v1153 = vpop.permute.xlu0 %1152
      %1156 = vrot.lane.b32.xlu0 %v1142, 112
      %v1157 = vpop.permute.xlu0 %1156
      %1158 = vrot.lane.b32.xlu0 %v1145, 112
      %v1159 = vpop.permute.xlu0 %1158
      %1162 = vrot.lane.b32.xlu0 %v1142, 104
      %v1163 = vpop.permute.xlu0 %1162
      %1164 = vrot.lane.b32.xlu0 %v1145, 104
      %v1165 = vpop.permute.xlu0 %1164
      %v1168 = vpack.c.bf16 %v1145, %v1142
      %v1169 = vpack.c.bf16 %v1153, %v1151
      %v1170 = vpack.c.bf16 %v1159, %v1157
      %v1171 = vpack.c.bf16 %v1165, %v1163
      %1176 = vrot.lane.b32.xlu0 %v1168, 96
      %v1177 = vpop.permute.xlu0 %1176
      %1178 = vrot.lane.b32.xlu0 %v1169, 96
      %v1179 = vpop.permute.xlu0 %1178
      %1180 = vrot.lane.b32.xlu0 %v1170, 96
      %v1181 = vpop.permute.xlu0 %1180
      %1182 = vrot.lane.b32.xlu0 %v1171, 96
      %v1183 = vpop.permute.xlu0 %1182
      %vm1184 = vcmask 64512
      %v1186 = vsel %vm1184, %v1168, 0
      %v1189 = vsel %vm1184, %v1169, 0
      %v1192 = vsel %vm1184, %v1170, 0
      %v1195 = vsel %vm1184, %v1171, 0
      %v1198 = vsel %vm1184, %v1177, 0
      %v1201 = vsel %vm1184, %v1179, 0
      %v1204 = vsel %vm1184, %v1181, 0
      %v1207 = vsel %vm1184, %v1183, 0
      %1209 = vmatprep.subr.bf16.mxu0 0
      %1210 = vmatpush1.bf16.xpose.msra.mxu0 0
      %1211 = vmatprep.subr.bf16.mxu0 0
      %1212 = vmatpush1.bf16.xpose.msra.mxu0 0
      %1213 = vmatprep.subr.bf16.mxu0 0
      %1214 = vmatpush1.bf16.xpose.msra.mxu0 0
      %1215 = vmatprep.subr.bf16.mxu0 0
      %1216 = vmatpush1.bf16.xpose.msra.mxu0 0
      %1217 = vmatprep.subr.bf16.mxu0 0
      %1218 = vmatpush1.bf16.xpose.msra.mxu0 %v1207
      %1219 = vmatprep.subr.bf16.mxu0 0
      %1220 = vmatpush1.bf16.xpose.msra.mxu0 %v1204
      %1221 = vmatprep.subr.bf16.mxu0 0
      %1222 = vmatpush1.bf16.xpose.msra.mxu0 %v1201
      %1223 = vmatprep.subr.bf16.mxu0 0
      %1224 = vmatpush1.bf16.xpose.msra.mxu0 %v1198
      %1225 = vmatprep.subr.bf16.mxu0 0
      %1226 = vmatpush2.bf16.xpose.msra.mxu0 0
      %1227 = vmatprep.subr.bf16.mxu0 0
      %1228 = vmatpush2.bf16.xpose.msra.mxu0 0
      %1229 = vmatprep.subr.bf16.mxu0 0
      %1230 = vmatpush2.bf16.xpose.msra.mxu0 0
      %1231 = vmatprep.subr.bf16.mxu0 0
      %1232 = vmatpush2.bf16.xpose.msra.mxu0 0
      %1233 = vmatprep.subr.bf16.mxu0 0
      %1234 = vmatpush2.bf16.xpose.msra.mxu0 0
      %1235 = vmatprep.subr.bf16.mxu0 0
      %1236 = vmatpush2.bf16.xpose.msra.mxu0 0
      %1237 = vmatprep.subr.bf16.mxu0 0
      %1238 = vmatpush2.bf16.xpose.msra.mxu0 0
      %1239 = vmatprep.subr.bf16.mxu0 0
      %1240 = vmatpush2.bf16.xpose.msra.mxu0 0
      %1241 = vmatprep.mubr.bf16.mxu0 0
      %1242 = vmatmul.mubr.bf16.gmra.mxu0 %v1186
      %v1243 = vpop.f32.mrf.mxu0
      %v1244 = vadd.f32 0.0, %v1243
      %v1245 = vpop.f32.mrf.mxu0
      %v1246 = vpop.f32.mrf.mxu0
      %v1247 = vadd.f32 0.0, %v1246
      %v1248 = vpop.f32.mrf.mxu0
      %1249 = vmatprep.mubr.bf16.mxu0 0
      %1250 = vmatmul.mubr.bf16.gmra.mxu0 %v1189
      %v1251 = vpop.f32.mrf.mxu0
      %v1252 = vadd.f32 0.0, %v1251
      %v1253 = vpop.f32.mrf.mxu0
      %v1254 = vpop.f32.mrf.mxu0
      %v1255 = vadd.f32 0.0, %v1254
      %v1256 = vpop.f32.mrf.mxu0
      %1257 = vmatprep.mubr.bf16.mxu0 0
      %1258 = vmatmul.mubr.bf16.gmra.mxu0 %v1192
      %v1259 = vpop.f32.mrf.mxu0
      %v1260 = vadd.f32 0.0, %v1259
      %v1261 = vpop.f32.mrf.mxu0
      %v1262 = vpop.f32.mrf.mxu0
      %v1263 = vadd.f32 0.0, %v1262
      %v1264 = vpop.f32.mrf.mxu0
      %1265 = vmatprep.mubr.bf16.mxu0 0
      %1266 = vmatmul.mubr.bf16.gmra.mxu0 %v1195
      %v1267 = vpop.f32.mrf.mxu0
      %v1268 = vadd.f32 0.0, %v1267
      %v1269 = vpop.f32.mrf.mxu0
      %v1270 = vpop.f32.mrf.mxu0
      %v1271 = vadd.f32 0.0, %v1270
      %v1272 = vpop.f32.mrf.mxu0
      %1273 = vdwg.mxu0
      %v1274 = vmul.f32 %v1244, 0.35355338
      %v1275 = vmul.f32 %v1247, 0.35355338
      %v1276 = vmul.f32 %v1252, 0.35355338
      %v1277 = vmul.f32 %v1255, 0.35355338
      %v1278 = vmul.f32 %v1260, 0.35355338
      %v1279 = vmul.f32 %v1263, 0.35355338
      %v1280 = vmul.f32 %v1268, 0.35355338
      %v1281 = vmul.f32 %v1271, 0.35355338
      %v1282 = vlaneseq
      %v1283 = vshrl.u32 %v1282, 7
      %v1284 = vadd.s32 %v1283, 8
      %v1285 = vadd.s32 %v1283, 16
      %v1286 = vadd.s32 %v1283, 24
      %v1287 = vadd.s32 %v1283, 32
      %v1288 = vadd.s32 %v1283, 40
      %v1289 = vadd.s32 %v1283, 48
      %v1290 = vadd.s32 %v1283, 56
      %v1291 = vlaneseq
      %v1292 = vand.u32 %v1291, 127
      %v1293 = vshra.s32 %v1283, 3
      %v1294 = vshra.s32 %v1284, 3
      %v1295 = vshra.s32 %v1285, 3
      %v1296 = vshra.s32 %v1286, 3
      %v1297 = vshra.s32 %v1287, 3
      %v1298 = vshra.s32 %v1288, 3
      %v1299 = vshra.s32 %v1289, 3
      %v1300 = vshra.s32 %v1290, 3
      %v1301 = vshra.s32 %v1292, 3
      %vm1302 = vcmp.eq.s32.totalorder %v1293, %v1301
      %vm1303 = vcmp.eq.s32.totalorder %v1294, %v1301
      %vm1304 = vcmp.eq.s32.totalorder %v1295, %v1301
      %vm1305 = vcmp.eq.s32.totalorder %v1296, %v1301
      %vm1306 = vcmp.eq.s32.totalorder %v1297, %v1301
      %vm1307 = vcmp.eq.s32.totalorder %v1298, %v1301
      %vm1308 = vcmp.eq.s32.totalorder %v1299, %v1301
      %vm1309 = vcmp.eq.s32.totalorder %v1300, %v1301
      %v1310 = vand.u32 %v1292, 7
      %vm1311 = vcmp.lt.s32.totalorder %v1310, 5
      %vm1312 = vmand %vm1302, %vm1311
      %vm1313 = vmand %vm1303, %vm1311
      %vm1314 = vmand %vm1304, %vm1311
      %vm1315 = vmand %vm1305, %vm1311
      %vm1316 = vmand %vm1306, %vm1311
      %vm1317 = vmand %vm1307, %vm1311
      %vm1318 = vmand %vm1308, %vm1311
      %vm1319 = vmand %vm1309, %vm1311
      %v1320 = vsel %vm1312, %v1274, -1e+30
      %v1321 = vsel %vm1313, %v1275, -1e+30
      %v1322 = vsel %vm1314, %v1276, -1e+30
      %v1323 = vsel %vm1315, %v1277, -1e+30
      %v1324 = vsel %vm1316, %v1278, -1e+30
      %v1325 = vsel %vm1317, %v1279, -1e+30
      %v1326 = vsel %vm1318, %v1280, -1e+30
      %v1327 = vsel %vm1319, %v1281, -1e+30
      %vm1328 = vcmask 523264
      %v1329 = vsel %vm1328, %v1320, -inf
      %1330 = vmax.xlane.f32.xlu0 %v1329
      %v1331 = vpop.xlane.xlu0 %1330
      %v1332 = vsel %vm1328, %v1321, -inf
      %1333 = vmax.xlane.f32.xlu0 %v1332
      %v1334 = vpop.xlane.xlu0 %1333
      %v1335 = vsel %vm1328, %v1322, -inf
      %1336 = vmax.xlane.f32.xlu0 %v1335
      %v1337 = vpop.xlane.xlu0 %1336
      %v1338 = vsel %vm1328, %v1323, -inf
      %1339 = vmax.xlane.f32.xlu0 %v1338
      %v1340 = vpop.xlane.xlu0 %1339
      %v1341 = vsel %vm1328, %v1324, -inf
      %1342 = vmax.xlane.f32.xlu0 %v1341
      %v1343 = vpop.xlane.xlu0 %1342
      %v1344 = vsel %vm1328, %v1325, -inf
      %1345 = vmax.xlane.f32.xlu0 %v1344
      %v1346 = vpop.xlane.xlu0 %1345
      %v1347 = vsel %vm1328, %v1326, -inf
      %1348 = vmax.xlane.f32.xlu0 %v1347
      %v1349 = vpop.xlane.xlu0 %1348
      %v1350 = vsel %vm1328, %v1327, -inf
      %1351 = vmax.xlane.f32.xlu0 %v1350
      %v1352 = vpop.xlane.xlu0 %1351
      %v1353 = vsub.f32 %v1320, %v1331
      %v1354 = vsub.f32 %v1321, %v1334
      %v1355 = vsub.f32 %v1322, %v1337
      %v1356 = vsub.f32 %v1323, %v1340
      %v1357 = vsub.f32 %v1324, %v1343
      %v1358 = vsub.f32 %v1325, %v1346
      %v1359 = vsub.f32 %v1326, %v1349
      %v1360 = vsub.f32 %v1327, %v1352
      %v1361 = vmul.f32 %v1353, 1.442695
      %v1362 = vpow.pop %v1361
      %v1363 = vmul.f32 %v1354, 1.442695
      %v1364 = vpow.pop %v1363
      %v1365 = vmul.f32 %v1355, 1.442695
      %v1366 = vpow.pop %v1365
      %v1367 = vmul.f32 %v1356, 1.442695
      %v1368 = vpow.pop %v1367
      %v1369 = vmul.f32 %v1357, 1.442695
      %v1370 = vpow.pop %v1369
      %v1371 = vmul.f32 %v1358, 1.442695
      %v1372 = vpow.pop %v1371
      %v1373 = vmul.f32 %v1359, 1.442695
      %v1374 = vpow.pop %v1373
      %v1375 = vmul.f32 %v1360, 1.442695
      %v1376 = vpow.pop %v1375
      %v1377 = vsel %vm1328, %v1362, 0.0
      %1378 = vadd.xlane.f32.xlu0 %v1377
      %v1379 = vpop.xlane.xlu0 %1378
      %v1380 = vsel %vm1328, %v1364, 0.0
      %1381 = vadd.xlane.f32.xlu0 %v1380
      %v1382 = vpop.xlane.xlu0 %1381
      %v1383 = vsel %vm1328, %v1366, 0.0
      %1384 = vadd.xlane.f32.xlu0 %v1383
      %v1385 = vpop.xlane.xlu0 %1384
      %v1386 = vsel %vm1328, %v1368, 0.0
      %1387 = vadd.xlane.f32.xlu0 %v1386
      %v1388 = vpop.xlane.xlu0 %1387
      %v1389 = vsel %vm1328, %v1370, 0.0
      %1390 = vadd.xlane.f32.xlu0 %v1389
      %v1391 = vpop.xlane.xlu0 %1390
      %v1392 = vsel %vm1328, %v1372, 0.0
      %1393 = vadd.xlane.f32.xlu0 %v1392
      %v1394 = vpop.xlane.xlu0 %1393
      %v1395 = vsel %vm1328, %v1374, 0.0
      %1396 = vadd.xlane.f32.xlu0 %v1395
      %v1397 = vpop.xlane.xlu0 %1396
      %v1398 = vsel %vm1328, %v1376, 0.0
      %1399 = vadd.xlane.f32.xlu0 %v1398
      %v1400 = vpop.xlane.xlu0 %1399
      %v1401 = vrcp.pop %v1379
      %v1402 = vrcp.pop %v1382
      %v1403 = vrcp.pop %v1385
      %v1404 = vrcp.pop %v1388
      %v1405 = vrcp.pop %v1391
      %v1406 = vrcp.pop %v1394
      %v1407 = vrcp.pop %v1397
      %v1408 = vrcp.pop %v1400
      %v1409 = vmul.f32 %v1362, %v1401
      %v1410 = vmul.f32 %v1364, %v1402
      %v1411 = vmul.f32 %v1366, %v1403
      %v1412 = vmul.f32 %v1368, %v1404
      %v1413 = vmul.f32 %v1370, %v1405
      %v1414 = vmul.f32 %v1372, %v1406
      %v1415 = vmul.f32 %v1374, %v1407
      %v1416 = vmul.f32 %v1376, %v1408
      %v1417 = vpack.c.bf16 %v1410, %v1409
      %v1418 = vpack.c.bf16 %v1412, %v1411
      %v1419 = vpack.c.bf16 %v1414, %v1413
      %v1420 = vpack.c.bf16 %v1416, %v1415
      %1421 = vrot.lane.b32.xlu0 %v1168, 64
      %v1422 = vpop.permute.xlu0 %1421
      %1423 = vrot.lane.b32.xlu0 %v1169, 64
      %v1424 = vpop.permute.xlu0 %1423
      %1425 = vrot.lane.b32.xlu0 %v1170, 64
      %v1426 = vpop.permute.xlu0 %1425
      %1427 = vrot.lane.b32.xlu0 %v1171, 64
      %v1428 = vpop.permute.xlu0 %1427
      %v1434 = vsel %vm1328, %v1417, 0
      %v1437 = vsel %vm1328, %v1418, 0
      %v1440 = vsel %vm1328, %v1419, 0
      %v1443 = vsel %vm1328, %v1420, 0
      %1445 = vmatprep.subr.bf16.mxu0 0
      %1446 = vmatpush1.bf16.msra.mxu0 0
      %1447 = vmatprep.subr.bf16.mxu0 0
      %1448 = vmatpush1.bf16.msra.mxu0 0
      %1449 = vmatprep.subr.bf16.mxu0 0
      %1450 = vmatpush1.bf16.msra.mxu0 0
      %1451 = vmatprep.subr.bf16.mxu0 0
      %1452 = vmatpush1.bf16.msra.mxu0 0
      %1453 = vmatprep.subr.bf16.mxu0 0
      %1454 = vmatpush1.bf16.msra.mxu0 %v1428
      %1455 = vmatprep.subr.bf16.mxu0 0
      %1456 = vmatpush1.bf16.msra.mxu0 %v1426
      %1457 = vmatprep.subr.bf16.mxu0 0
      %1458 = vmatpush1.bf16.msra.mxu0 %v1424
      %1459 = vmatprep.subr.bf16.mxu0 0
      %1460 = vmatpush1.bf16.msra.mxu0 %v1422
      %1461 = vmatprep.subr.bf16.mxu0 0
      %1462 = vmatpush2.bf16.msra.mxu0 0
      %1463 = vmatprep.subr.bf16.mxu0 0
      %1464 = vmatpush2.bf16.msra.mxu0 0
      %1465 = vmatprep.subr.bf16.mxu0 0
      %1466 = vmatpush2.bf16.msra.mxu0 0
      %1467 = vmatprep.subr.bf16.mxu0 0
      %1468 = vmatpush2.bf16.msra.mxu0 0
      %1469 = vmatprep.subr.bf16.mxu0 0
      %1470 = vmatpush2.bf16.msra.mxu0 0
      %1471 = vmatprep.subr.bf16.mxu0 0
      %1472 = vmatpush2.bf16.msra.mxu0 0
      %1473 = vmatprep.subr.bf16.mxu0 0
      %1474 = vmatpush2.bf16.msra.mxu0 0
      %1475 = vmatprep.subr.bf16.mxu0 0
      %1476 = vmatpush2.bf16.msra.mxu0 0
      %1477 = vmatprep.mubr.bf16.mxu0 0
      %1478 = vmatmul.mubr.bf16.gmra.mxu0 %v1434
      %v1479 = vpop.f32.mrf.mxu0
      %v1480 = vadd.f32 0.0, %v1479
      %v1481 = vpop.f32.mrf.mxu0
      %v1482 = vpop.f32.mrf.mxu0
      %v1483 = vadd.f32 0.0, %v1482
      %v1484 = vpop.f32.mrf.mxu0
      %1485 = vmatprep.mubr.bf16.mxu0 0
      %1486 = vmatmul.mubr.bf16.gmra.mxu0 %v1437
      %v1487 = vpop.f32.mrf.mxu0
      %v1488 = vadd.f32 0.0, %v1487
      %v1489 = vpop.f32.mrf.mxu0
      %v1490 = vpop.f32.mrf.mxu0
      %v1491 = vadd.f32 0.0, %v1490
      %v1492 = vpop.f32.mrf.mxu0
      %1493 = vmatprep.mubr.bf16.mxu0 0
      %1494 = vmatmul.mubr.bf16.gmra.mxu0 %v1440
      %v1495 = vpop.f32.mrf.mxu0
      %v1496 = vadd.f32 0.0, %v1495
      %v1497 = vpop.f32.mrf.mxu0
      %v1498 = vpop.f32.mrf.mxu0
      %v1499 = vadd.f32 0.0, %v1498
      %v1500 = vpop.f32.mrf.mxu0
      %1501 = vmatprep.mubr.bf16.mxu0 0
      %1502 = vmatmul.mubr.bf16.gmra.mxu0 %v1443
      %v1503 = vpop.f32.mrf.mxu0
      %v1504 = vadd.f32 0.0, %v1503
      %v1505 = vpop.f32.mrf.mxu0
      %v1506 = vpop.f32.mrf.mxu0
      %v1507 = vadd.f32 0.0, %v1506
      %v1508 = vpop.f32.mrf.mxu0
      %1509 = vdwg.mxu0
      %1512 = vrot.lane.b32.xlu0 %v1488, 8
      %v1513 = vpop.permute.xlu0 %1512
      %1514 = vrot.lane.b32.xlu0 %v1491, 8
      %v1515 = vpop.permute.xlu0 %1514
      %1520 = vrot.lane.b32.xlu0 %v1496, 16
      %v1521 = vpop.permute.xlu0 %1520
      %1522 = vrot.lane.b32.xlu0 %v1499, 16
      %v1523 = vpop.permute.xlu0 %1522
      %1528 = vrot.lane.b32.xlu0 %v1504, 24
      %v1529 = vpop.permute.xlu0 %1528
      %1530 = vrot.lane.b32.xlu0 %v1507, 24
      %v1531 = vpop.permute.xlu0 %1530
      %v1534 = vsel %vm1184, %v1480, %v1513
      %v1535 = vsel %vm1184, %v1483, %v1515
      %vm1536 = vcmask 130048
      %v1537 = vsel %vm1536, %v1534, %v1521
      %v1538 = vsel %vm1536, %v1535, %v1523
      %vm1539 = vcmask 195584
      %v1540 = vsel %vm1539, %v1537, %v1529
      %v1541 = vsel %vm1539, %v1538, %v1531
      %v1542 = vld [vmem:[%s788] sm:$0xf]
      %v1543 = vld [vmem:[%s788 + $0x4] sm:$0xf]
      %v1544 = vld [vmem:[%s788 + $0x8] sm:$0xf]
      %v1545 = vld [vmem:[%s788 + $0xc] sm:$0xf]
      %v1546 = vpack.c.bf16 %v1541, %v1540
      %v1551 = vunpack.c.l.b16 %v1542
      %v1552 = vunpack.c.l.b16 %v1543
      %v1553 = vunpack.c.l.b16 %v1544
      %v1554 = vunpack.c.l.b16 %v1545
      %v1555 = vpack.c.b16 %v1552, %v1551
      %v1556 = vpack.c.b16 %v1554, %v1553
      %v1560 = vsel %vm1036, %v1546, 0
      %1562 = vmatprep.subr.bf16.mxu0 0
      %1563 = vmatpush1.bf16.msra.mxu0 0
      %1564 = vmatprep.subr.bf16.mxu0 0
      %1565 = vmatpush1.bf16.msra.mxu0 0
      %1566 = vmatprep.subr.bf16.mxu0 0
      %1567 = vmatpush1.bf16.msra.mxu0 0
      %1568 = vmatprep.subr.bf16.mxu0 0
      %1569 = vmatpush1.bf16.msra.mxu0 0
      %1570 = vmatprep.subr.bf16.mxu0 0
      %1571 = vmatpush1.bf16.msra.mxu0 0
      %1572 = vmatprep.subr.bf16.mxu0 0
      %1573 = vmatpush1.bf16.msra.mxu0 0
      %1574 = vmatprep.subr.bf16.mxu0 0
      %1575 = vmatpush1.bf16.msra.mxu0 %v1556
      %1576 = vmatprep.subr.bf16.mxu0 0
      %1577 = vmatpush1.bf16.msra.mxu0 %v1555
      %1578 = vmatprep.subr.bf16.mxu0 0
      %1579 = vmatpush2.bf16.msra.mxu0 0
      %1580 = vmatprep.subr.bf16.mxu0 0
      %1581 = vmatpush2.bf16.msra.mxu0 0
      %1582 = vmatprep.subr.bf16.mxu0 0
      %1583 = vmatpush2.bf16.msra.mxu0 0
      %1584 = vmatprep.subr.bf16.mxu0 0
      %1585 = vmatpush2.bf16.msra.mxu0 0
      %1586 = vmatprep.subr.bf16.mxu0 0
      %1587 = vmatpush2.bf16.msra.mxu0 0
      %1588 = vmatprep.subr.bf16.mxu0 0
      %1589 = vmatpush2.bf16.msra.mxu0 0
      %1590 = vmatprep.subr.bf16.mxu0 0
      %1591 = vmatpush2.bf16.msra.mxu0 0
      %1592 = vmatprep.subr.bf16.mxu0 0
      %1593 = vmatpush2.bf16.msra.mxu0 0
      %1594 = vmatprep.mubr.bf16.mxu0 0
      %1595 = vmatmul.mubr.bf16.gmra.mxu0 %v1560
      %v1596 = vpop.f32.mrf.mxu0
      %v1597 = vadd.f32 0.0, %v1596
      %v1598 = vpop.f32.mrf.mxu0
      %v1599 = vpop.f32.mrf.mxu0
      %v1600 = vadd.f32 0.0, %v1599
      %v1601 = vpop.f32.mrf.mxu0
      %1602 = vdwg.mxu0
      %v1603 = vadd.f32 %v1032, %v1597
      %v1604 = vadd.f32 %v1033, %v1600
      %v1605 = vld [vmem:[%s791] sm:$0x1]
      %v1607 = vlaneseq
      %v1608 = vshrl.u32 %v1607, 7
      %v1609 = vsub.s32 0, %v1608
      %v1610 = vrot.slane %v1605, %v1609
      %v1612 = vadd.f32 %v1603, %v1610
      %v1613 = vadd.f32 %v1604, %v1610
      %v1614 = vld [vmem:[%s794] sm:$0x1]
      %v1615 = vld [vmem:[%s797] sm:$0x1]
      %v1616 = vsel %vm1036, %v1612, 0.0
      %1617 = vadd.xlane.f32.xlu0 %v1616
      %v1618 = vpop.xlane.xlu0 %1617
      %v1619 = vsel %vm1036, %v1613, 0.0
      %1620 = vadd.xlane.f32.xlu0 %v1619
      %v1621 = vpop.xlane.xlu0 %1620
      %v1622 = vmul.f32 %v1618, %v1043
      %v1623 = vmul.f32 %v1621, %v1043
      %v1624 = vsub.f32 %v1612, %v1622
      %v1625 = vsub.f32 %v1613, %v1623
      %v1626 = vmul.f32 %v1624, %v1624
      %v1627 = vmul.f32 %v1625, %v1625
      %v1628 = vsel %vm1036, %v1626, 0.0
      %1629 = vadd.xlane.f32.xlu0 %v1628
      %v1630 = vpop.xlane.xlu0 %1629
      %v1631 = vsel %vm1036, %v1627, 0.0
      %1632 = vadd.xlane.f32.xlu0 %v1631
      %v1633 = vpop.xlane.xlu0 %1632
      %v1634 = vmul.f32 %v1630, %v1043
      %v1635 = vmul.f32 %v1633, %v1043
      %v1636 = vadd.f32 %v1634, 1e-05
      %v1637 = vadd.f32 %v1635, 1e-05
      %v1638 = vrsqrt.pop %v1636
      %v1639 = vrsqrt.pop %v1637
      %v1640 = vmul.f32 %v1624, %v1638
      %v1641 = vmul.f32 %v1625, %v1639
      %v1643 = vlaneseq
      %v1644 = vshrl.u32 %v1643, 7
      %v1645 = vsub.s32 0, %v1644
      %v1646 = vrot.slane %v1614, %v1645
      %v1648 = vmul.f32 %v1640, %v1646
      %v1649 = vmul.f32 %v1641, %v1646
      %v1651 = vlaneseq
      %v1652 = vshrl.u32 %v1651, 7
      %v1653 = vsub.s32 0, %v1652
      %v1654 = vrot.slane %v1615, %v1653
      %v1656 = vadd.f32 %v1648, %v1654
      %v1657 = vadd.f32 %v1649, %v1654
      %v1658 = vld [vmem:[%s802] sm:$0xf]
      %v1659 = vld [vmem:[%s802 + $0x4] sm:$0xf]
      %v1660 = vld [vmem:[%s802 + $0x8] sm:$0xf]
      %v1661 = vld [vmem:[%s802 + $0xc] sm:$0xf]
      %v1662 = vpack.c.bf16 %v1657, %v1656
      %v1663 = vld [vmem:[%s805] sm:$0x1]
      %v1665 = vlaneseq
      %v1666 = vshrl.u32 %v1665, 7
      %v1667 = vsub.s32 0, %v1666
      %v1668 = vrot.slane %v1663, %v1667
      %v1674 = vunpack.c.l.b16 %v1658
      %v1675 = vunpack.c.l.b16 %v1659
      %v1676 = vunpack.c.l.b16 %v1660
      %v1677 = vunpack.c.l.b16 %v1661
      %v1678 = vpack.c.b16 %v1675, %v1674
      %v1679 = vpack.c.b16 %v1677, %v1676
      %v1683 = vsel %vm1036, %v1662, 0
      %1685 = vmatprep.subr.bf16.mxu0 0
      %1686 = vmatpush1.bf16.msra.mxu0 0
      %1687 = vmatprep.subr.bf16.mxu0 0
      %1688 = vmatpush1.bf16.msra.mxu0 0
      %1689 = vmatprep.subr.bf16.mxu0 0
      %1690 = vmatpush1.bf16.msra.mxu0 0
      %1691 = vmatprep.subr.bf16.mxu0 0
      %1692 = vmatpush1.bf16.msra.mxu0 0
      %1693 = vmatprep.subr.bf16.mxu0 0
      %1694 = vmatpush1.bf16.msra.mxu0 0
      %1695 = vmatprep.subr.bf16.mxu0 0
      %1696 = vmatpush1.bf16.msra.mxu0 0
      %1697 = vmatprep.subr.bf16.mxu0 0
      %1698 = vmatpush1.bf16.msra.mxu0 %v1679
      %1699 = vmatprep.subr.bf16.mxu0 0
      %1700 = vmatpush1.bf16.msra.mxu0 %v1678
      %1701 = vmatprep.subr.bf16.mxu0 0
      %1702 = vmatpush2.bf16.msra.mxu0 0
      %1703 = vmatprep.subr.bf16.mxu0 0
      %1704 = vmatpush2.bf16.msra.mxu0 0
      %1705 = vmatprep.subr.bf16.mxu0 0
      %1706 = vmatpush2.bf16.msra.mxu0 0
      %1707 = vmatprep.subr.bf16.mxu0 0
      %1708 = vmatpush2.bf16.msra.mxu0 0
      %1709 = vmatprep.subr.bf16.mxu0 0
      %1710 = vmatpush2.bf16.msra.mxu0 0
      %1711 = vmatprep.subr.bf16.mxu0 0
      %1712 = vmatpush2.bf16.msra.mxu0 0
      %1713 = vmatprep.subr.bf16.mxu0 0
      %1714 = vmatpush2.bf16.msra.mxu0 0
      %1715 = vmatprep.subr.bf16.mxu0 0
      %1716 = vmatpush2.bf16.msra.mxu0 0
      %1717 = vmatprep.mubr.bf16.mxu0 0
      %1718 = vmatmul.mubr.bf16.gmra.mxu0 %v1683
      %v1719 = vpop.f32.mrf.mxu0
      %v1720 = vadd.f32 %v1668, %v1719
      %v1721 = vpop.f32.mrf.mxu0
      %v1722 = vpop.f32.mrf.mxu0
      %v1723 = vadd.f32 %v1668, %v1722
      %v1724 = vpop.f32.mrf.mxu0
      %1725 = vdwg.mxu0
      %v1726 = vmul.f32 %v1720, 1.702
      %v1727 = vmul.f32 %v1723, 1.702
      %v1728 = vxor.u32 %v1726, 2147483648
      %v1729 = vxor.u32 %v1727, 2147483648
      %v1730 = vmul.f32 %v1728, 1.442695
      %v1731 = vpow.pop %v1730
      %v1732 = vmul.f32 %v1729, 1.442695
      %v1733 = vpow.pop %v1732
      %v1734 = vadd.f32 %v1731, 1.0
      %v1735 = vadd.f32 %v1733, 1.0
      %v1736 = vrcp.pop %v1734
      %v1737 = vmul.f32 1.0, %v1736
      %v1738 = vrcp.pop %v1735
      %v1739 = vmul.f32 1.0, %v1738
      %v1740 = vmul.f32 %v1720, %v1737
      %v1741 = vmul.f32 %v1723, %v1739
      %v1742 = vld [vmem:[%s810] sm:$0xf]
      %v1743 = vld [vmem:[%s810 + $0x4] sm:$0xf]
      %v1744 = vld [vmem:[%s810 + $0x8] sm:$0xf]
      %v1745 = vld [vmem:[%s810 + $0xc] sm:$0xf]
      %v1746 = vld [vmem:[%s810 + $0x10] sm:$0xf]
      %v1747 = vld [vmem:[%s810 + $0x14] sm:$0xf]
      %v1748 = vld [vmem:[%s810 + $0x18] sm:$0xf]
      %v1749 = vld [vmem:[%s810 + $0x1c] sm:$0xf]
      %v1750 = vld [vmem:[%s810 + $0x20] sm:$0xf]
      %v1751 = vld [vmem:[%s810 + $0x24] sm:$0xf]
      %v1752 = vld [vmem:[%s810 + $0x28] sm:$0xf]
      %v1753 = vld [vmem:[%s810 + $0x2c] sm:$0xf]
      %v1754 = vld [vmem:[%s810 + $0x30] sm:$0xf]
      %v1755 = vld [vmem:[%s810 + $0x34] sm:$0xf]
      %v1756 = vld [vmem:[%s810 + $0x38] sm:$0xf]
      %v1757 = vld [vmem:[%s810 + $0x3c] sm:$0xf]
      %v1758 = vpack.c.bf16 %v1741, %v1740
      %v1775 = vunpack.c.l.b16 %v1742
      %v1776 = vunpack.c.l.b16 %v1743
      %v1777 = vunpack.c.l.b16 %v1744
      %v1778 = vunpack.c.l.b16 %v1745
      %v1779 = vunpack.c.l.b16 %v1746
      %v1780 = vunpack.c.l.b16 %v1747
      %v1781 = vunpack.c.l.b16 %v1748
      %v1782 = vunpack.c.l.b16 %v1749
      %v1783 = vunpack.c.l.b16 %v1750
      %v1784 = vunpack.c.l.b16 %v1751
      %v1785 = vunpack.c.l.b16 %v1752
      %v1786 = vunpack.c.l.b16 %v1753
      %v1787 = vunpack.c.l.b16 %v1754
      %v1788 = vunpack.c.l.b16 %v1755
      %v1789 = vunpack.c.l.b16 %v1756
      %v1790 = vunpack.c.l.b16 %v1757
      %v1791 = vpack.c.b16 %v1776, %v1775
      %v1792 = vpack.c.b16 %v1778, %v1777
      %v1793 = vpack.c.b16 %v1780, %v1779
      %v1794 = vpack.c.b16 %v1782, %v1781
      %v1795 = vpack.c.b16 %v1784, %v1783
      %v1796 = vpack.c.b16 %v1786, %v1785
      %v1797 = vpack.c.b16 %v1788, %v1787
      %v1798 = vpack.c.b16 %v1790, %v1789
      %1807 = vmatprep.subr.bf16.mxu0 0
      %1808 = vmatpush1.bf16.msra.mxu0 %v1798
      %1809 = vmatprep.subr.bf16.mxu0 0
      %1810 = vmatpush1.bf16.msra.mxu0 %v1797
      %1811 = vmatprep.subr.bf16.mxu0 0
      %1812 = vmatpush1.bf16.msra.mxu0 %v1796
      %1813 = vmatprep.subr.bf16.mxu0 0
      %1814 = vmatpush1.bf16.msra.mxu0 %v1795
      %1815 = vmatprep.subr.bf16.mxu0 0
      %1816 = vmatpush1.bf16.msra.mxu0 %v1794
      %1817 = vmatprep.subr.bf16.mxu0 0
      %1818 = vmatpush1.bf16.msra.mxu0 %v1793
      %1819 = vmatprep.subr.bf16.mxu0 0
      %1820 = vmatpush1.bf16.msra.mxu0 %v1792
      %1821 = vmatprep.subr.bf16.mxu0 0
      %1822 = vmatpush1.bf16.msra.mxu0 %v1791
      %1823 = vmatprep.subr.bf16.mxu0 0
      %1824 = vmatpush2.bf16.msra.mxu0 0
      %1825 = vmatprep.subr.bf16.mxu0 0
      %1826 = vmatpush2.bf16.msra.mxu0 0
      %1827 = vmatprep.subr.bf16.mxu0 0
      %1828 = vmatpush2.bf16.msra.mxu0 0
      %1829 = vmatprep.subr.bf16.mxu0 0
      %1830 = vmatpush2.bf16.msra.mxu0 0
      %1831 = vmatprep.subr.bf16.mxu0 0
      %1832 = vmatpush2.bf16.msra.mxu0 0
      %1833 = vmatprep.subr.bf16.mxu0 0
      %1834 = vmatpush2.bf16.msra.mxu0 0
      %1835 = vmatprep.subr.bf16.mxu0 0
      %1836 = vmatpush2.bf16.msra.mxu0 0
      %1837 = vmatprep.subr.bf16.mxu0 0
      %1838 = vmatpush2.bf16.msra.mxu0 0
      %1839 = vmatprep.mubr.bf16.mxu0 0
      %1840 = vmatmul.mubr.bf16.gmra.mxu0 %v1758
      %v1841 = vpop.f32.mrf.mxu0
      %v1842 = vadd.f32 0.0, %v1841
      %v1843 = vpop.f32.mrf.mxu0
      %v1844 = vpop.f32.mrf.mxu0
      %v1845 = vadd.f32 0.0, %v1844
      %v1846 = vpop.f32.mrf.mxu0
      %1847 = vdwg.mxu0
      %v1848 = vadd.f32 %v1612, %v1842
      %v1849 = vadd.f32 %v1613, %v1845
      %v1850 = vld [vmem:[%s813] sm:$0x1]
      %v1852 = vlaneseq
      %v1853 = vshrl.u32 %v1852, 7
      %v1854 = vsub.s32 0, %v1853
      %v1855 = vrot.slane %v1850, %v1854
      %v1857 = vadd.f32 %v1848, %v1855
      %v1858 = vadd.f32 %v1849, %v1855
      %1859 = vst.msk [vmem:[#allocation2] sm:$0xff] %vm1036, %v1857
      %1860 = vst.msk [vmem:[#allocation2 + $0x8] sm:$0xff] %vm1036, %v1858
      %p1861 = scmp.eq.s32.totalorder %s32, 1
      // Predicated region
      $region109: #{clip_model_inc_forward.1} parent=103 // pred_check
        %p1862 = pneg %p1861
      $region110: #{clip_model_inc_forward.1} parent=103 // pred_check_branch
        %1864 = sbr.rel (%p1862) target = $region112
      $region111: #{clip_model_inc_forward.1} parent=103 // pred_region
        %v1866 = vrot.slane %v1858, 7
        %vm1868 = vcmask 1040384
        %v1869 = vsel %vm1868, %v1857, %v1866
        %v1870 = vld [vmem:[%s18] sm:$0x1]
        %v1871 = vld [vmem:[%s19] sm:$0x1]
        %vm1872 = vcmask 254976
        %v1873 = vsel %vm1872, %v1869, 0.0
        %1874 = vadd.xlane.f32.xlu0 %v1873
        %v1875 = vpop.xlane.xlu0 %1874
        %v1876 = vmul.f32 %v1875, %v1043
        %v1877 = vsub.f32 %v1869, %v1876
        %v1878 = vmul.f32 %v1877, %v1877
        %v1879 = vsel %vm1872, %v1878, 0.0
        %1880 = vadd.xlane.f32.xlu0 %v1879
        %v1881 = vpop.xlane.xlu0 %1880
        %v1882 = vmul.f32 %v1881, %v1043
        %v1883 = vadd.f32 %v1882, 1e-05
        %v1884 = vrsqrt.pop %v1883
        %v1885 = vmul.f32 %v1877, %v1884
        %v1887 = vlaneseq
        %v1888 = vshrl.u32 %v1887, 7
        %v1889 = vsub.s32 0, %v1888
        %v1890 = vrot.slane %v1870, %v1889
        %v1892 = vmul.f32 %v1885, %v1890
        %v1894 = vlaneseq
        %v1895 = vshrl.u32 %v1894, 7
        %v1896 = vsub.s32 0, %v1895
        %v1897 = vrot.slane %v1871, %v1896
        %v1899 = vadd.f32 %v1892, %v1897
        %v1900 = vld [vmem:[%s20] sm:$0xf]
        %v1901 = vld [vmem:[%s20 + $0x4] sm:$0xf]
        %v1902 = vld [vmem:[%s20 + $0x8] sm:$0xf]
        %v1903 = vld [vmem:[%s20 + $0xc] sm:$0xf]
        %v1904 = vpack.c.bf16 %v1899, %v1899
        %v1909 = vunpack.c.l.b16 %v1900
        %v1910 = vunpack.c.l.b16 %v1901
        %v1911 = vunpack.c.l.b16 %v1902
        %v1912 = vunpack.c.l.b16 %v1903
        %v1913 = vpack.c.b16 %v1910, %v1909
        %v1914 = vpack.c.b16 %v1912, %v1911
        %v1918 = vsel %vm1036, %v1904, 0
        %1920 = vmatprep.subr.bf16.mxu0 0
        %1921 = vmatpush1.bf16.msra.mxu0 0
        %1922 = vmatprep.subr.bf16.mxu0 0
        %1923 = vmatpush1.bf16.msra.mxu0 0
        %1924 = vmatprep.subr.bf16.mxu0 0
        %1925 = vmatpush1.bf16.msra.mxu0 0
        %1926 = vmatprep.subr.bf16.mxu0 0
        %1927 = vmatpush1.bf16.msra.mxu0 0
        %1928 = vmatprep.subr.bf16.mxu0 0
        %1929 = vmatpush1.bf16.msra.mxu0 0
        %1930 = vmatprep.subr.bf16.mxu0 0
        %1931 = vmatpush1.bf16.msra.mxu0 0
        %1932 = vmatprep.subr.bf16.mxu0 0
        %1933 = vmatpush1.bf16.msra.mxu0 %v1914
        %1934 = vmatprep.subr.bf16.mxu0 0
        %1935 = vmatpush1.bf16.msra.mxu0 %v1913
        %1936 = vmatprep.subr.bf16.mxu0 0
        %1937 = vmatpush2.bf16.msra.mxu0 0
        %1938 = vmatprep.subr.bf16.mxu0 0
        %1939 = vmatpush2.bf16.msra.mxu0 0
        %1940 = vmatprep.subr.bf16.mxu0 0
        %1941 = vmatpush2.bf16.msra.mxu0 0
        %1942 = vmatprep.subr.bf16.mxu0 0
        %1943 = vmatpush2.bf16.msra.mxu0 0
        %1944 = vmatprep.subr.bf16.mxu0 0
        %1945 = vmatpush2.bf16.msra.mxu0 0
        %1946 = vmatprep.subr.bf16.mxu0 0
        %1947 = vmatpush2.bf16.msra.mxu0 0
        %1948 = vmatprep.subr.bf16.mxu0 0
        %1949 = vmatpush2.bf16.msra.mxu0 0
        %1950 = vmatprep.subr.bf16.mxu0 0
        %1951 = vmatpush2.bf16.msra.mxu0 0
        %1952 = vmatprep.mubr.bf16.mxu0 0
        %1953 = vmatmul.mubr.bf16.gmra.mxu0 %v1918
        %v1954 = vpop.f32.mrf.mxu0
        %v1955 = vadd.f32 0.0, %v1954
        %v1956 = vpop.f32.mrf.mxu0
        %v1957 = vpop.f32.mrf.mxu0
        %v1958 = vpop.f32.mrf.mxu0
        %1959 = vdwg.mxu0
        %1960 = vst [vmem:[%s21] sm:$0x3] %v1955
      $region112: #{clip_model_inc_forward.1} parent=103 // pred_fallthru
        _
      // Predicated region
      $region113: #{clip_model_inc_forward.1} parent=103 // pred_check
        %p1961 = pneg %p546
      $region114: #{clip_model_inc_forward.1} parent=103 // pred_check_branch
        %1963 = sbr.rel (%p1961) target = $region116
      $region115: #{clip_model_inc_forward.1} parent=103 // pred_region
        _
      $region116: #{clip_model_inc_forward.1} parent=103 // pred_fallthru
        _
      // Predicated region
      $region117: #{clip_model_inc_forward.1} parent=103 // pred_check
        %p1964 = pneg %p546
      $region118: #{clip_model_inc_forward.1} parent=103 // pred_check_branch
        %1966 = sbr.rel (%p1964) target = $region120
      $region119: #{clip_model_inc_forward.1} parent=103 // pred_region
        _
      $region120: #{clip_model_inc_forward.1} parent=103 // pred_fallthru
        _
    $region104: #{clip_model_inc_forward.1} parent=5 // pred_fallthru
      _
    %p1967 = scmp.le.s32.totalorder 2, %s27
    // Predicated region
    $region121: #{clip_model_inc_forward.1} parent=5 // pred_check
      %p1968 = pneg %p1967
    $region122: #{clip_model_inc_forward.1} parent=5 // pred_check_branch
      %1970 = sbr.rel (%p1968) target = $region124
    $region123: #{clip_model_inc_forward.1} parent=5 // pred_region
      %s1971 = ssub.s32 %s27, 2
    $region124: #{clip_model_inc_forward.1} parent=5 // pred_fallthru
      _
  $region6: #{clip_model_inc_forward.1} parent=0 // loop_footer
    %s31 = sadd.s32 1, %s27
  $region7: #{clip_model_inc_forward.1} parent=0 // loop_footer_branch
    %26 = sbr.rel target = $region3
  $region8: #{clip_model_inc_forward.1} parent=0 // loop_exit
    _

</llo_original>
